<compile_context>
chip_gen: v5e
topology: v5e:2x2
jax: 0.10.0
libtpu: 0.0.40
codegen_flags: <defaults>
</compile_context>

<pallas_src>
import functools

import jax
import jax.numpy as jnp
from jax import lax
from jax.experimental import pallas as pl
from jax.experimental.pallas import tpu as pltpu


_VMEM_CAP = None


def _round_up(x, m):
    return (x + m - 1) // m * m


def _vmem_capacity_bytes():
    """Physical VMEM of the current TPU generation (cached)."""
    global _VMEM_CAP
    if _VMEM_CAP is None:
        try:
            _VMEM_CAP = int(pltpu.get_tpu_info().vmem_capacity_bytes)
        except Exception:
            _VMEM_CAP = 64 << 20        # conservative (v7x-sized) fallback
    return _VMEM_CAP


def _spec(shape, index_map, buffers=None):
    """BlockSpec with an optional pipeline buffer-count override.

    buffers=1 is used for constant-index resident weights so they are not
    double-buffered.  Falls back to a plain BlockSpec if this jax version's
    BlockSpec does not take pipeline_mode.
    """
    if buffers is None:
        return pl.BlockSpec(shape, index_map)
    try:
        return pl.BlockSpec(shape, index_map,
                            pipeline_mode=pl.Buffered(buffer_count=buffers))
    except TypeError:
        return pl.BlockSpec(shape, index_map)


def _fast_recip(x):
    # EUP approximate reciprocal + one Newton-Raphson step (~full f32 precision).
    r = pl.reciprocal(x, approx=True)
    return r * (2.0 - x * r)


def _largest_divisor_tile(total, target, quantum=128):
    """Largest multiple of `quantum` that divides `total` and is <= max(target, quantum)."""
    best = quantum
    t = quantum
    limit = min(total, max(target, quantum))
    while t <= limit:
        if total % t == 0:
            best = t
        t += quantum
    return best


# ---------------------------------------------------------------------------
# Fused LayerNorm + FeedForward (Linear -> Mish -> Linear) + residual.
# Grid: (row tiles, hidden tiles); hidden axis is the innermost reduction.
# ---------------------------------------------------------------------------
def _ffn_kernel(x_ref, g_ref, b_ref, w1_ref, b1_ref, w2_ref, b2_ref, o_ref,
                xn_ref, acc_ref, *, true_dim):
    h_idx = pl.program_id(1)
    n_h = pl.num_programs(1)

    @pl.when(h_idx == 0)
    def _():
        # LayerNorm over the true feature count (padded columns / gamma / beta are zero).
        xf = x_ref[...].astype(jnp.float32)
        inv_d = 1.0 / float(true_dim)
        mu = jnp.sum(xf, axis=-1, keepdims=True) * inv_d
        ex2 = jnp.sum(xf * xf, axis=-1, keepdims=True) * inv_d
        var = jnp.maximum(ex2 - mu * mu, 0.0)
        xn = (xf - mu) * lax.rsqrt(var + 1e-5) * g_ref[...] + b_ref[...]
        xn_ref[...] = xn.astype(xn_ref.dtype)
        acc_ref[...] = jnp.zeros_like(acc_ref)

    # fc1 tile on the MXU in the model dtype, f32 accumulation.
    h = jnp.dot(xn_ref[...], w1_ref[...],
                preferred_element_type=jnp.float32) + b1_ref[...]

    # Mish(h) = h * tanh(softplus(h)).  Single-exp form:
    #   t = e^h,  tanh(softplus(h)) = (t^2 + 2t) / (t^2 + 2t + 2), saturating to h for h>20.
    t = jnp.exp(jnp.minimum(h, 20.0))
    num = t * (t + 2.0)
    act = jnp.where(h > 20.0, h, h * num * _fast_recip(num + 2.0))

    acc_ref[...] += jnp.dot(act.astype(w2_ref.dtype), w2_ref[...],
                            preferred_element_type=jnp.float32)

    @pl.when(h_idx == n_h - 1)
    def _():
        y = acc_ref[...] + b2_ref[...] + x_ref[...].astype(jnp.float32)
        o_ref[...] = y.astype(o_ref.dtype)        # fused residual


def feed_forward_prenorm(x_pad, gamma_p, beta_p, w1_p, b1_p, w2_p, b2_p, *, true_dim):
    """x_pad: (b, n, cp) channel-padded tokens. Returns x_pad + FFN(LN(x_pad)) (still padded)."""
    b, n, cp = x_pad.shape
    assert w1_p.shape[0] == cp and w2_p.shape[1] == cp
    hp = w1_p.shape[1]
    dtype = x_pad.dtype
    isz = jnp.dtype(dtype).itemsize
    cap = _vmem_capacity_bytes()

    m = b * n
    block_m = 512 if cap >= (96 << 20) else 256      # bigger M tiles on 128 MiB parts
    tm = min(block_m, _round_up(m, 8))
    mp = _round_up(m, tm)

    # Keep W1/W2 resident when small; otherwise stream the hidden dim through the grid.
    resident = 2 * cp * hp * isz <= cap // 4
    th = hp if resident else _largest_divisor_tile(hp, 512)
    nh = hp // th
    nbuf_w = 1 if nh == 1 else 2

    x2d = x_pad.reshape(m, cp)
    if mp != m:
        x2d = jnp.pad(x2d, ((0, mp - m), (0, 0)))

    need = (4 * tm * cp * isz                         # in/out tiles (double-buffered)
            + nbuf_w * 2 * cp * th * isz              # W1/W2 tiles
            + nbuf_w * th * 4 + 3 * cp * 4            # b1 + gamma/beta/b2 (f32)
            + tm * cp * isz + tm * cp * 4             # xn scratch + f32 accumulator
            + 4 * tm * th * 4)                        # f32 temporaries (h / Mish)
    vmem_limit = int(min(max(int(need * 1.5), 32 << 20), (cap * 3) // 4))

    w_buf = 1 if nh == 1 else None
    out = pl.pallas_call(
        functools.partial(_ffn_kernel, true_dim=true_dim),
        out_shape=jax.ShapeDtypeStruct((mp, cp), dtype),
        grid_spec=pltpu.PrefetchScalarGridSpec(
            num_scalar_prefetch=0,
            grid=(mp // tm, nh),
            in_specs=[
                pl.BlockSpec((tm, cp), lambda i, h: (i, 0)),        # x rows
                _spec((1, cp), lambda i, h: (0, 0), buffers=1),     # LN gamma
                _spec((1, cp), lambda i, h: (0, 0), buffers=1),     # LN beta
                _spec((cp, th), lambda i, h: (0, h), buffers=w_buf),  # W1 tile
                _spec((1, th), lambda i, h: (0, h), buffers=w_buf),   # b1 tile
                _spec((th, cp), lambda i, h: (h, 0), buffers=w_buf),  # W2 tile
                _spec((1, cp), lambda i, h: (0, 0), buffers=1),     # b2
            ],
            out_specs=pl.BlockSpec((tm, cp), lambda i, h: (i, 0)),
            scratch_shapes=[pltpu.VMEM((tm, cp), dtype),            # LN(x) (model dtype)
                            pltpu.VMEM((tm, cp), jnp.float32)],     # f32 accumulator
        ),
        compiler_params=pltpu.CompilerParams(
            dimension_semantics=("parallel", "arbitrary"),
            vmem_limit_bytes=vmem_limit,
        ),
    )(x2d, gamma_p, beta_p, w1_p, b1_p, w2_p, b2_p)
    return out[:m].reshape(b, n, cp)


# ---------------------------------------------------------------------------
# Fused LayerNorm + relative-position-bias multi-head attention + residual.
# ---------------------------------------------------------------------------
def _attn_kernel(x_ref, g_ref, b_ref, wqkv_ref, wo_ref, bo_ref, bias_ref, o_ref,
                 ocat_ref, *, heads, dim_head, scale, true_dim):
    x = x_ref[0]                                     # (n, cp), model dtype
    dtype = x.dtype
    xf = x.astype(jnp.float32)

    # LayerNorm over the true feature count (padded columns / gamma / beta are zero).
    inv_d = 1.0 / float(true_dim)
    mu = jnp.sum(xf, axis=-1, keepdims=True) * inv_d
    ex2 = jnp.sum(xf * xf, axis=-1, keepdims=True) * inv_d
    var = jnp.maximum(ex2 - mu * mu, 0.0)
    xn = ((xf - mu) * lax.rsqrt(var + 1e-5) * g_ref[...] + b_ref[...]).astype(dtype)

    # qkv projection: model-dtype MXU, f32 accumulate, round back to the model dtype.
    qkv = jnp.dot(xn, wqkv_ref[...],
                  preferred_element_type=jnp.float32).astype(dtype)   # (n, 3*inner)

    inner = heads * dim_head
    for h in range(heads):                                            # static unroll
        q = qkv[:, h * dim_head:(h + 1) * dim_head]
        k = qkv[:, inner + h * dim_head:inner + (h + 1) * dim_head]
        v = qkv[:, 2 * inner + h * dim_head:2 * inner + (h + 1) * dim_head]
        dots = lax.dot_general(q, k, (((1,), (1,)), ((), ())),
                               preferred_element_type=jnp.float32) * scale
        dots = dots + bias_ref[h].astype(jnp.float32)
        dots = dots - jnp.max(dots, axis=-1, keepdims=True)
        p = jnp.exp(dots)
        p = (p * _fast_recip(jnp.sum(p, axis=-1, keepdims=True))).astype(dtype)
        o_h = jnp.dot(p, v, preferred_element_type=jnp.float32)       # (n, dh)
        ocat_ref[:, h * dim_head:(h + 1) * dim_head] = o_h.astype(ocat_ref.dtype)

    # Single output projection with full K=inner contraction depth.
    y = jnp.dot(ocat_ref[...], wo_ref[...],
                preferred_element_type=jnp.float32) + bo_ref[...]
    o_ref[0] = (xf + y).astype(o_ref.dtype)          # fused residual


def attention_prenorm(x_pad, gamma_p, beta_p, wqkv_p, wo_p, bo_p, bias, *,
                      heads, dim_head, true_dim):
    """x_pad: (b, n, cp) channel-padded tokens. Returns x_pad + Attn(LN(x_pad)) (padded)."""
    b, n, cp = x_pad.shape
    inner = heads * dim_head
    op = wo_p.shape[1]
    assert op == cp, "residual add requires oup == inp for the downsample=False path"
    assert wqkv_p.shape == (cp, 3 * inner) and wo_p.shape[0] == inner
    dtype = x_pad.dtype
    isz = jnp.dtype(dtype).itemsize
    cap = _vmem_capacity_bytes()
    scale = float(dim_head) ** -0.5

    need = (2 * n * cp * isz + 2 * n * op * isz                         # x / out tiles
            + (cp * 3 * inner + inner * op + heads * n * n) * isz       # weights + bias (1 buf)
            + (op + 2 * cp) * 4                                         # bo / gamma / beta
            + n * inner * isz                                           # head-concat scratch
            + n * cp * 4 + n * 3 * inner * (4 + isz)                    # xf / qkv temps
            + 4 * n * n * 4 + n * op * 4)                               # softmax temps + y
    vmem_limit = int(min(max(int(need * 1.5), 32 << 20), (cap * 3) // 4))

    # TODO(synk): for very large n with tiny batch, split into a flash-style (q-tile, kv-tile)
    # grid (separate qkv-projection kernel) so both v7x TensorCores get work.
    out = pl.pallas_call(
        functools.partial(_attn_kernel, heads=heads, dim_head=dim_head,
                          scale=scale, true_dim=true_dim),
        out_shape=jax.ShapeDtypeStruct((b, n, op), dtype),
        grid_spec=pltpu.PrefetchScalarGridSpec(
            num_scalar_prefetch=0,
            grid=(b,),
            in_specs=[
                pl.BlockSpec((1, n, cp), lambda i: (i, 0, 0)),             # x tokens
                _spec((1, cp), lambda i: (0, 0), buffers=1),               # LN gamma
                _spec((1, cp), lambda i: (0, 0), buffers=1),               # LN beta
                _spec((cp, 3 * inner), lambda i: (0, 0), buffers=1),       # Wqkv (no bias)
                _spec((inner, op), lambda i: (0, 0), buffers=1),           # Wo
                _spec((1, op), lambda i: (0, 0), buffers=1),               # bo
                _spec((heads, n, n), lambda i: (0, 0, 0), buffers=1),      # relative bias
            ],
            out_specs=pl.BlockSpec((1, n, op), lambda i: (i, 0, 0)),
            scratch_shapes=[pltpu.VMEM((n, inner), dtype)],                # head concat
        ),
        compiler_params=pltpu.CompilerParams(
            dimension_semantics=("parallel",),
            vmem_limit_bytes=vmem_limit,
        ),
    )(x_pad, gamma_p, beta_p, wqkv_p, wo_p, bo_p, bias)
    return out


def make_relative_bias(table, ih, iw):
    """table: ((2*ih-1)*(2*iw-1), heads) -> (heads, n, n), exactly as the PyTorch module."""
    coords = jnp.stack(jnp.meshgrid(jnp.arange(ih), jnp.arange(iw), indexing="ij"))
    coords = coords.reshape(2, -1)                       # (2, n)
    rel = coords[:, :, None] - coords[:, None, :]        # (2, n, n)
    rel = rel.at[0].add(ih - 1)
    rel = rel.at[1].add(iw - 1)
    rel = rel.at[0].multiply(2 * iw - 1)
    rel_index = rel.sum(0).reshape(-1)                   # (n*n,)
    n = ih * iw
    bias = jnp.take(table, rel_index, axis=0)            # (n*n, heads)
    return bias.T.reshape(table.shape[1], n, n)          # (heads, n, n)


def prepare_transformer_params(params, *, ih, iw, heads, dim_head):
    """Pads weights to lane-dense (128-multiple) shapes and precomputes the relative bias.

    Called once per parameter set (outside the per-step jit)."""
    wqkv, wo, w1, w2 = params["wqkv"], params["wo"], params["w1"], params["w2"]
    c = wqkv.shape[0]
    oup = wo.shape[1]
    hidden = w1.shape[1]
    assert oup == c, "downsample=False path requires inp == oup"
    dtype = wqkv.dtype

    cp = _round_up(c, 128)
    op = _round_up(oup, 128)
    hp = _round_up(hidden, 128)

    def padv(v, p):  # 1-D param -> (1, p) f32 row, zero padded
        return jnp.pad(v.reshape(1, -1).astype(jnp.float32),
                       ((0, 0), (0, p - v.shape[0])))

    bias = make_relative_bias(params["rel_bias_table"], ih, iw).astype(dtype)
    return {
        "ln1_g": padv(params["ln1_g"], cp),
        "ln1_b": padv(params["ln1_b"], cp),
        "wqkv": jnp.pad(wqkv, ((0, cp - c), (0, 0))),
        "wo": jnp.pad(wo, ((0, 0), (0, op - oup))),
        "bo": padv(params["bo"], op),
        "bias": bias,
        "ln2_g": padv(params["ln2_g"], op),
        "ln2_b": padv(params["ln2_b"], op),
        "w1": jnp.pad(w1, ((0, op - oup), (0, hp - hidden))),
        "b1": padv(params["b1"], hp),
        "w2": jnp.pad(w2, ((0, hp - hidden), (0, op - oup))),
        "b2": padv(params["b2"], op),
    }


@functools.partial(jax.jit, static_argnames=("heads", "dim_head"))
def transformer_forward(x, prep, *, heads=8, dim_head=32):
    """x: (b, c, ih, iw). downsample=False path of the PyTorch Transformer block."""
    b, c, ih, iw = x.shape
    n = ih * iw
    cp = prep["wqkv"].shape[0]

    t = x.reshape(b, c, n).transpose(0, 2, 1)             # b c ih iw -> b (ih iw) c
    if cp != c:
        t = jnp.pad(t, ((0, 0), (0, 0), (0, cp - c)))     # lane-dense channel pad (once)

    # Channel-padded token layout is kept between the two kernels (no re-pad round trip).
    t = attention_prenorm(t, prep["ln1_g"], prep["ln1_b"], prep["wqkv"],
                          prep["wo"], prep["bo"], prep["bias"],
                          heads=heads, dim_head=dim_head, true_dim=c)
    t = feed_forward_prenorm(t, prep["ln2_g"], prep["ln2_b"], prep["w1"],
                             prep["b1"], prep["w2"], prep["b2"], true_dim=c)
    return t[:, :, :c].transpose(0, 2, 1).reshape(b, c, ih, iw)
    # TODO(synk): downsample=True path (MaxPool2d(3,2,1) x2 + 1x1 Conv2d proj) not implemented.


# ---------------------------------------------------------------------------
# Pure-JAX reference for the self-test.
# ---------------------------------------------------------------------------
def _layer_norm_ref(x, g, b, eps=1e-5):
    mu = x.mean(-1, keepdims=True)
    var = ((x - mu) ** 2).mean(-1, keepdims=True)
    return (x - mu) / jnp.sqrt(var + eps) * g + b


def _mish_ref(x):
    return x * jnp.tanh(jax.nn.softplus(x))


def _transformer_ref(x, params, *, heads, dim_head):
    b, c, ih, iw = x.shape
    n = ih * iw
    inner = heads * dim_head
    scale = dim_head ** -0.5
    t = x.reshape(b, c, n).transpose(0, 2, 1)

    xn = _layer_norm_ref(t, params["ln1_g"], params["ln1_b"])
    qkv = xn @ params["wqkv"]
    q, k, v = jnp.split(qkv, 3, axis=-1)
    to_heads = lambda a: a.reshape(b, n, heads, dim_head).transpose(0, 2, 1, 3)
    q, k, v = map(to_heads, (q, k, v))
    dots = jnp.einsum("bhnd,bhmd->bhnm", q, k) * scale
    dots = dots + make_relative_bias(params["rel_bias_table"], ih, iw)[None]
    attn = jax.nn.softmax(dots, axis=-1)
    o = jnp.einsum("bhnm,bhmd->bhnd", attn, v).transpose(0, 2, 1, 3).reshape(b, n, inner)
    t = t + (o @ params["wo"] + params["bo"].reshape(1, 1, -1))

    xn = _layer_norm_ref(t, params["ln2_g"], params["ln2_b"])
    h = _mish_ref(xn @ params["w1"] + params["b1"].reshape(1, 1, -1))
    t = t + (h @ params["w2"] + params["b2"].reshape(1, 1, -1))
    return t.transpose(0, 2, 1).reshape(b, c, ih, iw)


if __name__ == "__main__":
    batch, inp, ih, iw = 2, 32, 4, 4
    heads, dim_head = 8, 32
    oup = inp
    inner = heads * dim_head
    hidden = 4 * inp

    key = jax.random.PRNGKey(0)
    ks = jax.random.split(key, 12)

    def unif(k, shape, fan_in):
        lim = 1.0 / (fan_in ** 0.5)
        return jax.random.uniform(k, shape, minval=-lim, maxval=lim, dtype=jnp.float32)

    x = jax.random.normal(ks[0], (batch, inp, ih, iw), dtype=jnp.float32)
    params = {
        "ln1_g": 1.0 + 0.1 * jax.random.normal(ks[1], (inp,), dtype=jnp.float32),
        "ln1_b": 0.1 * jax.random.normal(ks[2], (inp,), dtype=jnp.float32),
        "wqkv": unif(ks[3], (inp, 3 * inner), inp),
        "wo": unif(ks[4], (inner, oup), inner),
        "bo": unif(ks[5], (oup,), inner),
        "rel_bias_table": 0.1 * jax.random.normal(
            ks[6], ((2 * ih - 1) * (2 * iw - 1), heads), dtype=jnp.float32),
        "ln2_g": 1.0 + 0.1 * jax.random.normal(ks[7], (oup,), dtype=jnp.float32),
        "ln2_b": 0.1 * jax.random.normal(ks[8], (oup,), dtype=jnp.float32),
        "w1": unif(ks[9], (oup, hidden), oup),
        "b1": unif(ks[10], (hidden,), oup),
        "w2": unif(ks[11], (hidden, oup), hidden),
        "b2": jnp.zeros((oup,), dtype=jnp.float32),
    }

    # Bias gather + weight padding done once, outside the per-step jit.
    prep = prepare_transformer_params(params, ih=ih, iw=iw, heads=heads, dim_head=dim_head)

    out = transformer_forward(x, prep, heads=heads, dim_head=dim_head)
    out = jax.block_until_ready(out)

    ref = _transformer_ref(x, params, heads=heads, dim_head=dim_head)
    assert out.shape == x.shape
    max_err = float(jnp.max(jnp.abs(out - ref)))
    assert jnp.allclose(out, ref, atol=5e-4, rtol=5e-4), f"mismatch vs reference, max_err={max_err}"

    print("KERNEL_OK")
</pallas_src>

<mosaic_0001>
module attributes {stable_mosaic.version = 11 : i64} {
  func.func @_ffn_kernel(%arg0: i32, %arg1: i32, %arg2: memref<32x128xf32, #tpu.memory_space<vmem>>, %arg3: memref<1x128xf32, #tpu.memory_space<vmem>>, %arg4: memref<1x128xf32, #tpu.memory_space<vmem>>, %arg5: memref<128x128xf32, #tpu.memory_space<vmem>>, %arg6: memref<1x128xf32, #tpu.memory_space<vmem>>, %arg7: memref<128x128xf32, #tpu.memory_space<vmem>>, %arg8: memref<1x128xf32, #tpu.memory_space<vmem>>, %arg9: memref<32x128xf32, #tpu.memory_space<vmem>>, %arg10: memref<32x128xf32, #tpu.memory_space<vmem>>, %arg11: memref<32x128xf32, #tpu.memory_space<vmem>>) attributes {dimension_semantics = [#tpu.dimension_semantics<parallel>, #tpu.dimension_semantics<arbitrary>], iteration_bounds = array<i64: 1, 1>, scalar_prefetch = 0 : i64, scratch_operands = 2 : i64, tpu.core_type = #tpu.core_type<tc>, window_params = [{transform_indices = @transform_0, window_bounds = array<i64: 32, 128>}, {pipeline_mode = #tpu.pipeline_mode<synchronous>, transform_indices = @transform_1, window_bounds = array<i64: 1, 128>}, {pipeline_mode = #tpu.pipeline_mode<synchronous>, transform_indices = @transform_2, window_bounds = array<i64: 1, 128>}, {pipeline_mode = #tpu.pipeline_mode<synchronous>, transform_indices = @transform_3, window_bounds = array<i64: 128, 128>}, {pipeline_mode = #tpu.pipeline_mode<synchronous>, transform_indices = @transform_4, window_bounds = array<i64: 1, 128>}, {pipeline_mode = #tpu.pipeline_mode<synchronous>, transform_indices = @transform_5, window_bounds = array<i64: 128, 128>}, {pipeline_mode = #tpu.pipeline_mode<synchronous>, transform_indices = @transform_6, window_bounds = array<i64: 1, 128>}, {transform_indices = @transform_7, window_bounds = array<i64: 32, 128>}]} {
    %c0_i32 = arith.constant 0 : i32
    %0 = arith.cmpi eq, %arg1, %c0_i32 : i32
    %1 = arith.extui %0 : i1 to i32
    %c0_i32_0 = arith.constant 0 : i32
    %2 = arith.cmpi ne, %1, %c0_i32_0 : i32
    scf.if %2 {
      %c0_20 = arith.constant 0 : index
      %c0_21 = arith.constant 0 : index
      %35 = vector.load %arg2[%c0_20, %c0_21] : memref<32x128xf32, #tpu.memory_space<vmem>>, vector<32x128xf32>
      %cst_22 = arith.constant dense<0.000000e+00> : vector<32xf32>
      %36 = vector.multi_reduction <add>, %35, %cst_22 [1] : vector<32x128xf32> to vector<32xf32>
      %37 = vector.shape_cast %36 : vector<32xf32> to vector<32x1xf32>
      %cst_23 = arith.constant 3.125000e-02 : f32
      %38 = vector.broadcast %cst_23 : f32 to vector<32x1xf32>
      %39 = arith.mulf %37, %38 : vector<32x1xf32>
      %40 = arith.mulf %35, %35 : vector<32x128xf32>
      %cst_24 = arith.constant dense<0.000000e+00> : vector<32xf32>
      %41 = vector.multi_reduction <add>, %40, %cst_24 [1] : vector<32x128xf32> to vector<32xf32>
      %42 = vector.shape_cast %41 : vector<32xf32> to vector<32x1xf32>
      %cst_25 = arith.constant 3.125000e-02 : f32
      %43 = vector.broadcast %cst_25 : f32 to vector<32x1xf32>
      %44 = arith.mulf %42, %43 : vector<32x1xf32>
      %45 = arith.mulf %39, %39 : vector<32x1xf32>
      %46 = arith.subf %44, %45 : vector<32x1xf32>
      %cst_26 = arith.constant 0.000000e+00 : f32
      %47 = vector.broadcast %cst_26 : f32 to vector<32x1xf32>
      %48 = arith.maximumf %46, %47 : vector<32x1xf32>
      %49 = vector.broadcast %39 : vector<32x1xf32> to vector<32x128xf32>
      %50 = arith.subf %35, %49 : vector<32x128xf32>
      %cst_27 = arith.constant 9.99999974E-6 : f32
      %51 = vector.broadcast %cst_27 : f32 to vector<32x1xf32>
      %52 = arith.addf %48, %51 : vector<32x1xf32>
      %53 = math.rsqrt %52 : vector<32x1xf32>
      %54 = vector.broadcast %53 : vector<32x1xf32> to vector<32x128xf32>
      %55 = arith.mulf %50, %54 : vector<32x128xf32>
      %c0_28 = arith.constant 0 : index
      %c0_29 = arith.constant 0 : index
      %56 = vector.load %arg3[%c0_28, %c0_29] : memref<1x128xf32, #tpu.memory_space<vmem>>, vector<1x128xf32>
      %57 = vector.broadcast %56 : vector<1x128xf32> to vector<32x128xf32>
      %58 = arith.mulf %55, %57 : vector<32x128xf32>
      %c0_30 = arith.constant 0 : index
      %c0_31 = arith.constant 0 : index
      %59 = vector.load %arg4[%c0_30, %c0_31] : memref<1x128xf32, #tpu.memory_space<vmem>>, vector<1x128xf32>
      %60 = vector.broadcast %59 : vector<1x128xf32> to vector<32x128xf32>
      %61 = arith.addf %58, %60 : vector<32x128xf32>
      %c0_32 = arith.constant 0 : index
      %c0_33 = arith.constant 0 : index
      %62 = vector.load %arg10[%c0_32, %c0_33] : memref<32x128xf32, #tpu.memory_space<vmem>>, vector<32x128xf32>
      tpu.vector_store %arg10[%c0_32, %c0_33], %61 {strides = array<i32>} : memref<32x128xf32, #tpu.memory_space<vmem>>, vector<32x128xf32>,
      %cst_34 = arith.constant 0.000000e+00 : f32
      %63 = vector.broadcast %cst_34 : f32 to vector<32x128xf32>
      %c0_35 = arith.constant 0 : index
      %c0_36 = arith.constant 0 : index
      %64 = vector.load %arg11[%c0_35, %c0_36] : memref<32x128xf32, #tpu.memory_space<vmem>>, vector<32x128xf32>
      tpu.vector_store %arg11[%c0_35, %c0_36], %63 {strides = array<i32>} : memref<32x128xf32, #tpu.memory_space<vmem>>, vector<32x128xf32>,
    } else {
    }
    %c0 = arith.constant 0 : index
    %c0_1 = arith.constant 0 : index
    %3 = vector.load %arg10[%c0, %c0_1] : memref<32x128xf32, #tpu.memory_space<vmem>>, vector<32x128xf32>
    %c0_2 = arith.constant 0 : index
    %c0_3 = arith.constant 0 : index
    %4 = vector.load %arg5[%c0_2, %c0_3] : memref<128x128xf32, #tpu.memory_space<vmem>>, vector<128x128xf32>
    %cst = arith.constant dense<0.000000e+00> : vector<32x128xf32>
    %5 = tpu.matmul %3, %4, %cst {dimension_numbers = #tpu.dot_dimension_numbers<[1], [0], [0], [1], [0, 0, 1, 1], [], []>} : vector<32x128xf32>, vector<128x128xf32>, vector<32x128xf32> -> vector<32x128xf32>
    %c0_4 = arith.constant 0 : index
    %c0_5 = arith.constant 0 : index
    %6 = vector.load %arg6[%c0_4, %c0_5] : memref<1x128xf32, #tpu.memory_space<vmem>>, vector<1x128xf32>
    %7 = vector.broadcast %6 : vector<1x128xf32> to vector<32x128xf32>
    %8 = arith.addf %5, %7 : vector<32x128xf32>
    %cst_6 = arith.constant 2.000000e+01 : f32
    %9 = vector.broadcast %cst_6 : f32 to vector<32x128xf32>
    %10 = arith.minimumf %8, %9 : vector<32x128xf32>
    %11 = math.exp %10 : vector<32x128xf32>
    %cst_7 = arith.constant 2.000000e+00 : f32
    %12 = vector.broadcast %cst_7 : f32 to vector<32x128xf32>
    %13 = arith.addf %11, %12 : vector<32x128xf32>
    %14 = arith.mulf %11, %13 : vector<32x128xf32>
    %cst_8 = arith.constant 2.000000e+01 : f32
    %15 = vector.broadcast %cst_8 : f32 to vector<32x128xf32>
    %16 = arith.cmpf ogt, %8, %15 : vector<32x128xf32>
    %17 = arith.mulf %8, %14 : vector<32x128xf32>
    %cst_9 = arith.constant 2.000000e+00 : f32
    %18 = vector.broadcast %cst_9 : f32 to vector<32x128xf32>
    %19 = arith.addf %14, %18 : vector<32x128xf32>
    %20 = tpu.reciprocal %19 {approx = true} : vector<32x128xf32> -> vector<32x128xf32>
    %21 = arith.mulf %19, %20 : vector<32x128xf32>
    %cst_10 = arith.constant 2.000000e+00 : f32
    %22 = vector.broadcast %cst_10 : f32 to vector<32x128xf32>
    %23 = arith.subf %22, %21 : vector<32x128xf32>
    %24 = arith.mulf %20, %23 : vector<32x128xf32>
    %25 = arith.mulf %17, %24 : vector<32x128xf32>
    %26 = arith.select %16, %8, %25 : vector<32x128xi1>, vector<32x128xf32>
    %c0_11 = arith.constant 0 : index
    %c0_12 = arith.constant 0 : index
    %27 = vector.load %arg11[%c0_11, %c0_12] : memref<32x128xf32, #tpu.memory_space<vmem>>, vector<32x128xf32>
    %c0_13 = arith.constant 0 : index
    %c0_14 = arith.constant 0 : index
    %28 = vector.load %arg7[%c0_13, %c0_14] : memref<128x128xf32, #tpu.memory_space<vmem>>, vector<128x128xf32>
    %cst_15 = arith.constant dense<0.000000e+00> : vector<32x128xf32>
    %29 = tpu.matmul %26, %28, %cst_15 {dimension_numbers = #tpu.dot_dimension_numbers<[1], [0], [0], [1], [0, 0, 1, 1], [], []>} : vector<32x128xf32>, vector<128x128xf32>, vector<32x128xf32> -> vector<32x128xf32>
    %30 = arith.addf %27, %29 : vector<32x128xf32>
    %c0_16 = arith.constant 0 : index
    %c0_17 = arith.constant 0 : index
    %31 = vector.load %arg11[%c0_16, %c0_17] : memref<32x128xf32, #tpu.memory_space<vmem>>, vector<32x128xf32>
    tpu.vector_store %arg11[%c0_16, %c0_17], %30 {strides = array<i32>} : memref<32x128xf32, #tpu.memory_space<vmem>>, vector<32x128xf32>,
    %c0_i32_18 = arith.constant 0 : i32
    %32 = arith.cmpi eq, %arg1, %c0_i32_18 : i32
    %33 = arith.extui %32 : i1 to i32
    %c0_i32_19 = arith.constant 0 : i32
    %34 = arith.cmpi ne, %33, %c0_i32_19 : i32
    scf.if %34 {
      %c0_20 = arith.constant 0 : index
      %c0_21 = arith.constant 0 : index
      %35 = vector.load %arg11[%c0_20, %c0_21] : memref<32x128xf32, #tpu.memory_space<vmem>>, vector<32x128xf32>
      %c0_22 = arith.constant 0 : index
      %c0_23 = arith.constant 0 : index
      %36 = vector.load %arg8[%c0_22, %c0_23] : memref<1x128xf32, #tpu.memory_space<vmem>>, vector<1x128xf32>
      %37 = vector.broadcast %36 : vector<1x128xf32> to vector<32x128xf32>
      %38 = arith.addf %35, %37 : vector<32x128xf32>
      %c0_24 = arith.constant 0 : index
      %c0_25 = arith.constant 0 : index
      %39 = vector.load %arg2[%c0_24, %c0_25] : memref<32x128xf32, #tpu.memory_space<vmem>>, vector<32x128xf32>
      %40 = arith.addf %38, %39 : vector<32x128xf32>
      %c0_26 = arith.constant 0 : index
      %c0_27 = arith.constant 0 : index
      %41 = vector.load %arg9[%c0_26, %c0_27] : memref<32x128xf32, #tpu.memory_space<vmem>>, vector<32x128xf32>
      tpu.vector_store %arg9[%c0_26, %c0_27], %40 {strides = array<i32>} : memref<32x128xf32, #tpu.memory_space<vmem>>, vector<32x128xf32>,
    } else {
    }
    return
  }
  func.func @transform_0(%arg0: i32, %arg1: i32) -> (i32, i32) {
    %c0_i32 = arith.constant 0 : i32
    %c0_i32_0 = arith.constant 0 : i32
    return %arg0, %c0_i32 : i32, i32
  }
  func.func @transform_1(%arg0: i32, %arg1: i32) -> (i32, i32) {
    %c0_i32 = arith.constant 0 : i32
    %c0_i32_0 = arith.constant 0 : i32
    %c0_i32_1 = arith.constant 0 : i32
    return %c0_i32, %c0_i32_0 : i32, i32
  }
  func.func @transform_2(%arg0: i32, %arg1: i32) -> (i32, i32) {
    %c0_i32 = arith.constant 0 : i32
    %c0_i32_0 = arith.constant 0 : i32
    %c0_i32_1 = arith.constant 0 : i32
    return %c0_i32, %c0_i32_0 : i32, i32
  }
  func.func @transform_3(%arg0: i32, %arg1: i32) -> (i32, i32) {
    %c0_i32 = arith.constant 0 : i32
    %c0_i32_0 = arith.constant 0 : i32
    return %c0_i32, %arg1 : i32, i32
  }
  func.func @transform_4(%arg0: i32, %arg1: i32) -> (i32, i32) {
    %c0_i32 = arith.constant 0 : i32
    %c0_i32_0 = arith.constant 0 : i32
    return %c0_i32, %arg1 : i32, i32
  }
  func.func @transform_5(%arg0: i32, %arg1: i32) -> (i32, i32) {
    %c0_i32 = arith.constant 0 : i32
    %c0_i32_0 = arith.constant 0 : i32
    return %arg1, %c0_i32 : i32, i32
  }
  func.func @transform_6(%arg0: i32, %arg1: i32) -> (i32, i32) {
    %c0_i32 = arith.constant 0 : i32
    %c0_i32_0 = arith.constant 0 : i32
    %c0_i32_1 = arith.constant 0 : i32
    return %c0_i32, %c0_i32_0 : i32, i32
  }
  func.func @transform_7(%arg0: i32, %arg1: i32) -> (i32, i32) {
    %c0_i32 = arith.constant 0 : i32
    %c0_i32_0 = arith.constant 0 : i32
    return %arg0, %c0_i32 : i32, i32
  }
}

module attributes {stable_mosaic.version = 11 : i64} {
  func.func @_attn_kernel(%arg0: i32, %arg1: memref<1x16x128xf32, #tpu.memory_space<vmem>>, %arg2: memref<1x128xf32, #tpu.memory_space<vmem>>, %arg3: memref<1x128xf32, #tpu.memory_space<vmem>>, %arg4: memref<128x768xf32, #tpu.memory_space<vmem>>, %arg5: memref<256x128xf32, #tpu.memory_space<vmem>>, %arg6: memref<1x128xf32, #tpu.memory_space<vmem>>, %arg7: memref<8x16x16xf32, #tpu.memory_space<vmem>>, %arg8: memref<1x16x128xf32, #tpu.memory_space<vmem>>, %arg9: memref<16x256xf32, #tpu.memory_space<vmem>>) attributes {dimension_semantics = [#tpu.dimension_semantics<parallel>], iteration_bounds = array<i64: 2>, scalar_prefetch = 0 : i64, scratch_operands = 1 : i64, tpu.core_type = #tpu.core_type<tc>, window_params = [{transform_indices = @transform_0, window_bounds = array<i64: 1, 16, 128>}, {pipeline_mode = #tpu.pipeline_mode<synchronous>, transform_indices = @transform_1, window_bounds = array<i64: 1, 128>}, {pipeline_mode = #tpu.pipeline_mode<synchronous>, transform_indices = @transform_2, window_bounds = array<i64: 1, 128>}, {pipeline_mode = #tpu.pipeline_mode<synchronous>, transform_indices = @transform_3, window_bounds = array<i64: 128, 768>}, {pipeline_mode = #tpu.pipeline_mode<synchronous>, transform_indices = @transform_4, window_bounds = array<i64: 256, 128>}, {pipeline_mode = #tpu.pipeline_mode<synchronous>, transform_indices = @transform_5, window_bounds = array<i64: 1, 128>}, {pipeline_mode = #tpu.pipeline_mode<synchronous>, transform_indices = @transform_6, window_bounds = array<i64: 8, 16, 16>}, {transform_indices = @transform_7, window_bounds = array<i64: 1, 16, 128>}]} {
    %c0 = arith.constant 0 : index
    %c0_0 = arith.constant 0 : index
    %c0_1 = arith.constant 0 : index
    %0 = vector.load %arg1[%c0, %c0_0, %c0_1] : memref<1x16x128xf32, #tpu.memory_space<vmem>>, vector<1x16x128xf32>
    %1 = vector.shape_cast %0 : vector<1x16x128xf32> to vector<16x128xf32>
    %cst = arith.constant dense<0.000000e+00> : vector<16xf32>
    %2 = vector.multi_reduction <add>, %1, %cst [1] : vector<16x128xf32> to vector<16xf32>
    %3 = vector.shape_cast %2 : vector<16xf32> to vector<16x1xf32>
    %cst_2 = arith.constant 3.125000e-02 : f32
    %4 = vector.broadcast %cst_2 : f32 to vector<16x1xf32>
    %5 = arith.mulf %3, %4 : vector<16x1xf32>
    %6 = arith.mulf %1, %1 : vector<16x128xf32>
    %cst_3 = arith.constant dense<0.000000e+00> : vector<16xf32>
    %7 = vector.multi_reduction <add>, %6, %cst_3 [1] : vector<16x128xf32> to vector<16xf32>
    %8 = vector.shape_cast %7 : vector<16xf32> to vector<16x1xf32>
    %cst_4 = arith.constant 3.125000e-02 : f32
    %9 = vector.broadcast %cst_4 : f32 to vector<16x1xf32>
    %10 = arith.mulf %8, %9 : vector<16x1xf32>
    %11 = arith.mulf %5, %5 : vector<16x1xf32>
    %12 = arith.subf %10, %11 : vector<16x1xf32>
    %cst_5 = arith.constant 0.000000e+00 : f32
    %13 = vector.broadcast %cst_5 : f32 to vector<16x1xf32>
    %14 = arith.maximumf %12, %13 : vector<16x1xf32>
    %15 = vector.broadcast %5 : vector<16x1xf32> to vector<16x128xf32>
    %16 = arith.subf %1, %15 : vector<16x128xf32>
    %cst_6 = arith.constant 9.99999974E-6 : f32
    %17 = vector.broadcast %cst_6 : f32 to vector<16x1xf32>
    %18 = arith.addf %14, %17 : vector<16x1xf32>
    %19 = math.rsqrt %18 : vector<16x1xf32>
    %20 = vector.broadcast %19 : vector<16x1xf32> to vector<16x128xf32>
    %21 = arith.mulf %16, %20 : vector<16x128xf32>
    %c0_7 = arith.constant 0 : index
    %c0_8 = arith.constant 0 : index
    %22 = vector.load %arg2[%c0_7, %c0_8] : memref<1x128xf32, #tpu.memory_space<vmem>>, vector<1x128xf32>
    %23 = vector.broadcast %22 : vector<1x128xf32> to vector<16x128xf32>
    %24 = arith.mulf %21, %23 : vector<16x128xf32>
    %c0_9 = arith.constant 0 : index
    %c0_10 = arith.constant 0 : index
    %25 = vector.load %arg3[%c0_9, %c0_10] : memref<1x128xf32, #tpu.memory_space<vmem>>, vector<1x128xf32>
    %26 = vector.broadcast %25 : vector<1x128xf32> to vector<16x128xf32>
    %27 = arith.addf %24, %26 : vector<16x128xf32>
    %c0_11 = arith.constant 0 : index
    %c0_12 = arith.constant 0 : index
    %28 = vector.load %arg4[%c0_11, %c0_12] : memref<128x768xf32, #tpu.memory_space<vmem>>, vector<128x768xf32>
    %cst_13 = arith.constant dense<0.000000e+00> : vector<16x768xf32>
    %29 = tpu.matmul %27, %28, %cst_13 {dimension_numbers = #tpu.dot_dimension_numbers<[1], [0], [0], [1], [0, 0, 1, 1], [], []>} : vector<16x128xf32>, vector<128x768xf32>, vector<16x768xf32> -> vector<16x768xf32>
    %30 = vector.extract_strided_slice %29 {offsets = [0, 0], sizes = [16, 32], strides = [1, 1]} : vector<16x768xf32> to vector<16x32xf32>
    %31 = vector.extract_strided_slice %29 {offsets = [0, 256], sizes = [16, 32], strides = [1, 1]} : vector<16x768xf32> to vector<16x32xf32>
    %32 = vector.extract_strided_slice %29 {offsets = [0, 512], sizes = [16, 32], strides = [1, 1]} : vector<16x768xf32> to vector<16x32xf32>
    %cst_14 = arith.constant dense<0.000000e+00> : vector<16x16xf32>
    %33 = tpu.matmul %30, %31, %cst_14 {dimension_numbers = #tpu.dot_dimension_numbers<[1], [1], [0], [0], [0, 0, 1, 0], [], []>} : vector<16x32xf32>, vector<16x32xf32>, vector<16x16xf32> -> vector<16x16xf32>
    %cst_15 = arith.constant 0.176776692 : f32
    %34 = vector.broadcast %cst_15 : f32 to vector<16x16xf32>
    %35 = arith.mulf %33, %34 : vector<16x16xf32>
    %c0_16 = arith.constant 0 : index
    %c0_17 = arith.constant 0 : index
    %c0_18 = arith.constant 0 : index
    %36 = vector.load %arg7[%c0_16, %c0_17, %c0_18] : memref<8x16x16xf32, #tpu.memory_space<vmem>>, vector<1x16x16xf32>
    %37 = vector.shape_cast %36 : vector<1x16x16xf32> to vector<16x16xf32>
    %38 = arith.addf %35, %37 : vector<16x16xf32>
    %cst_19 = arith.constant dense<0xFF800000> : vector<16xf32>
    %39 = vector.multi_reduction <maximumf>, %38, %cst_19 [1] : vector<16x16xf32> to vector<16xf32>
    %40 = vector.shape_cast %39 : vector<16xf32> to vector<16x1xf32>
    %41 = vector.broadcast %40 : vector<16x1xf32> to vector<16x16xf32>
    %42 = arith.subf %38, %41 : vector<16x16xf32>
    %43 = math.exp %42 : vector<16x16xf32>
    %cst_20 = arith.constant dense<0.000000e+00> : vector<16xf32>
    %44 = vector.multi_reduction <add>, %43, %cst_20 [1] : vector<16x16xf32> to vector<16xf32>
    %45 = vector.shape_cast %44 : vector<16xf32> to vector<16x1xf32>
    %46 = tpu.reciprocal %45 {approx = true} : vector<16x1xf32> -> vector<16x1xf32>
    %47 = arith.mulf %45, %46 : vector<16x1xf32>
    %cst_21 = arith.constant 2.000000e+00 : f32
    %48 = vector.broadcast %cst_21 : f32 to vector<16x1xf32>
    %49 = arith.subf %48, %47 : vector<16x1xf32>
    %50 = arith.mulf %46, %49 : vector<16x1xf32>
    %51 = vector.broadcast %50 : vector<16x1xf32> to vector<16x16xf32>
    %52 = arith.mulf %43, %51 : vector<16x16xf32>
    %cst_22 = arith.constant dense<0.000000e+00> : vector<16x32xf32>
    %53 = tpu.matmul %52, %32, %cst_22 {dimension_numbers = #tpu.dot_dimension_numbers<[1], [0], [0], [1], [0, 0, 1, 1], [], []>} : vector<16x16xf32>, vector<16x32xf32>, vector<16x32xf32> -> vector<16x32xf32>
    %c0_23 = arith.constant 0 : index
    %c0_24 = arith.constant 0 : index
    %54 = vector.load %arg9[%c0_23, %c0_24] : memref<16x256xf32, #tpu.memory_space<vmem>>, vector<16x32xf32>
    tpu.vector_store %arg9[%c0_23, %c0_24], %53 {strides = array<i32>} : memref<16x256xf32, #tpu.memory_space<vmem>>, vector<16x32xf32>,
    %55 = vector.extract_strided_slice %29 {offsets = [0, 32], sizes = [16, 32], strides = [1, 1]} : vector<16x768xf32> to vector<16x32xf32>
    %56 = vector.extract_strided_slice %29 {offsets = [0, 288], sizes = [16, 32], strides = [1, 1]} : vector<16x768xf32> to vector<16x32xf32>
    %57 = vector.extract_strided_slice %29 {offsets = [0, 544], sizes = [16, 32], strides = [1, 1]} : vector<16x768xf32> to vector<16x32xf32>
    %cst_25 = arith.constant dense<0.000000e+00> : vector<16x16xf32>
    %58 = tpu.matmul %55, %56, %cst_25 {dimension_numbers = #tpu.dot_dimension_numbers<[1], [1], [0], [0], [0, 0, 1, 0], [], []>} : vector<16x32xf32>, vector<16x32xf32>, vector<16x16xf32> -> vector<16x16xf32>
    %cst_26 = arith.constant 0.176776692 : f32
    %59 = vector.broadcast %cst_26 : f32 to vector<16x16xf32>
    %60 = arith.mulf %58, %59 : vector<16x16xf32>
    %c1 = arith.constant 1 : index
    %c0_27 = arith.constant 0 : index
    %c0_28 = arith.constant 0 : index
    %61 = vector.load %arg7[%c1, %c0_27, %c0_28] : memref<8x16x16xf32, #tpu.memory_space<vmem>>, vector<1x16x16xf32>
    %62 = vector.shape_cast %61 : vector<1x16x16xf32> to vector<16x16xf32>
    %63 = arith.addf %60, %62 : vector<16x16xf32>
    %cst_29 = arith.constant dense<0xFF800000> : vector<16xf32>
    %64 = vector.multi_reduction <maximumf>, %63, %cst_29 [1] : vector<16x16xf32> to vector<16xf32>
    %65 = vector.shape_cast %64 : vector<16xf32> to vector<16x1xf32>
    %66 = vector.broadcast %65 : vector<16x1xf32> to vector<16x16xf32>
    %67 = arith.subf %63, %66 : vector<16x16xf32>
    %68 = math.exp %67 : vector<16x16xf32>
    %cst_30 = arith.constant dense<0.000000e+00> : vector<16xf32>
    %69 = vector.multi_reduction <add>, %68, %cst_30 [1] : vector<16x16xf32> to vector<16xf32>
    %70 = vector.shape_cast %69 : vector<16xf32> to vector<16x1xf32>
    %71 = tpu.reciprocal %70 {approx = true} : vector<16x1xf32> -> vector<16x1xf32>
    %72 = arith.mulf %70, %71 : vector<16x1xf32>
    %cst_31 = arith.constant 2.000000e+00 : f32
    %73 = vector.broadcast %cst_31 : f32 to vector<16x1xf32>
    %74 = arith.subf %73, %72 : vector<16x1xf32>
    %75 = arith.mulf %71, %74 : vector<16x1xf32>
    %76 = vector.broadcast %75 : vector<16x1xf32> to vector<16x16xf32>
    %77 = arith.mulf %68, %76 : vector<16x16xf32>
    %cst_32 = arith.constant dense<0.000000e+00> : vector<16x32xf32>
    %78 = tpu.matmul %77, %57, %cst_32 {dimension_numbers = #tpu.dot_dimension_numbers<[1], [0], [0], [1], [0, 0, 1, 1], [], []>} : vector<16x16xf32>, vector<16x32xf32>, vector<16x32xf32> -> vector<16x32xf32>
    %c0_33 = arith.constant 0 : index
    %c32 = arith.constant 32 : index
    %79 = vector.load %arg9[%c0_33, %c32] : memref<16x256xf32, #tpu.memory_space<vmem>>, vector<16x32xf32>
    tpu.vector_store %arg9[%c0_33, %c32], %78 {strides = array<i32>} : memref<16x256xf32, #tpu.memory_space<vmem>>, vector<16x32xf32>,
    %80 = vector.extract_strided_slice %29 {offsets = [0, 64], sizes = [16, 32], strides = [1, 1]} : vector<16x768xf32> to vector<16x32xf32>
    %81 = vector.extract_strided_slice %29 {offsets = [0, 320], sizes = [16, 32], strides = [1, 1]} : vector<16x768xf32> to vector<16x32xf32>
    %82 = vector.extract_strided_slice %29 {offsets = [0, 576], sizes = [16, 32], strides = [1, 1]} : vector<16x768xf32> to vector<16x32xf32>
    %cst_34 = arith.constant dense<0.000000e+00> : vector<16x16xf32>
    %83 = tpu.matmul %80, %81, %cst_34 {dimension_numbers = #tpu.dot_dimension_numbers<[1], [1], [0], [0], [0, 0, 1, 0], [], []>} : vector<16x32xf32>, vector<16x32xf32>, vector<16x16xf32> -> vector<16x16xf32>
    %cst_35 = arith.constant 0.176776692 : f32
    %84 = vector.broadcast %cst_35 : f32 to vector<16x16xf32>
    %85 = arith.mulf %83, %84 : vector<16x16xf32>
    %c2 = arith.constant 2 : index
    %c0_36 = arith.constant 0 : index
    %c0_37 = arith.constant 0 : index
    %86 = vector.load %arg7[%c2, %c0_36, %c0_37] : memref<8x16x16xf32, #tpu.memory_space<vmem>>, vector<1x16x16xf32>
    %87 = vector.shape_cast %86 : vector<1x16x16xf32> to vector<16x16xf32>
    %88 = arith.addf %85, %87 : vector<16x16xf32>
    %cst_38 = arith.constant dense<0xFF800000> : vector<16xf32>
    %89 = vector.multi_reduction <maximumf>, %88, %cst_38 [1] : vector<16x16xf32> to vector<16xf32>
    %90 = vector.shape_cast %89 : vector<16xf32> to vector<16x1xf32>
    %91 = vector.broadcast %90 : vector<16x1xf32> to vector<16x16xf32>
    %92 = arith.subf %88, %91 : vector<16x16xf32>
    %93 = math.exp %92 : vector<16x16xf32>
    %cst_39 = arith.constant dense<0.000000e+00> : vector<16xf32>
    %94 = vector.multi_reduction <add>, %93, %cst_39 [1] : vector<16x16xf32> to vector<16xf32>
    %95 = vector.shape_cast %94 : vector<16xf32> to vector<16x1xf32>
    %96 = tpu.reciprocal %95 {approx = true} : vector<16x1xf32> -> vector<16x1xf32>
    %97 = arith.mulf %95, %96 : vector<16x1xf32>
    %cst_40 = arith.constant 2.000000e+00 : f32
    %98 = vector.broadcast %cst_40 : f32 to vector<16x1xf32>
    %99 = arith.subf %98, %97 : vector<16x1xf32>
    %100 = arith.mulf %96, %99 : vector<16x1xf32>
    %101 = vector.broadcast %100 : vector<16x1xf32> to vector<16x16xf32>
    %102 = arith.mulf %93, %101 : vector<16x16xf32>
    %cst_41 = arith.constant dense<0.000000e+00> : vector<16x32xf32>
    %103 = tpu.matmul %102, %82, %cst_41 {dimension_numbers = #tpu.dot_dimension_numbers<[1], [0], [0], [1], [0, 0, 1, 1], [], []>} : vector<16x16xf32>, vector<16x32xf32>, vector<16x32xf32> -> vector<16x32xf32>
    %c0_42 = arith.constant 0 : index
    %c64 = arith.constant 64 : index
    %104 = vector.load %arg9[%c0_42, %c64] : memref<16x256xf32, #tpu.memory_space<vmem>>, vector<16x32xf32>
    tpu.vector_store %arg9[%c0_42, %c64], %103 {strides = array<i32>} : memref<16x256xf32, #tpu.memory_space<vmem>>, vector<16x32xf32>,
    %105 = vector.extract_strided_slice %29 {offsets = [0, 96], sizes = [16, 32], strides = [1, 1]} : vector<16x768xf32> to vector<16x32xf32>
    %106 = vector.extract_strided_slice %29 {offsets = [0, 352], sizes = [16, 32], strides = [1, 1]} : vector<16x768xf32> to vector<16x32xf32>
    %107 = vector.extract_strided_slice %29 {offsets = [0, 608], sizes = [16, 32], strides = [1, 1]} : vector<16x768xf32> to vector<16x32xf32>
    %cst_43 = arith.constant dense<0.000000e+00> : vector<16x16xf32>
    %108 = tpu.matmul %105, %106, %cst_43 {dimension_numbers = #tpu.dot_dimension_numbers<[1], [1], [0], [0], [0, 0, 1, 0], [], []>} : vector<16x32xf32>, vector<16x32xf32>, vector<16x16xf32> -> vector<16x16xf32>
    %cst_44 = arith.constant 0.176776692 : f32
    %109 = vector.broadcast %cst_44 : f32 to vector<16x16xf32>
    %110 = arith.mulf %108, %109 : vector<16x16xf32>
    %c3 = arith.constant 3 : index
    %c0_45 = arith.constant 0 : index
    %c0_46 = arith.constant 0 : index
    %111 = vector.load %arg7[%c3, %c0_45, %c0_46] : memref<8x16x16xf32, #tpu.memory_space<vmem>>, vector<1x16x16xf32>
    %112 = vector.shape_cast %111 : vector<1x16x16xf32> to vector<16x16xf32>
    %113 = arith.addf %110, %112 : vector<16x16xf32>
    %cst_47 = arith.constant dense<0xFF800000> : vector<16xf32>
    %114 = vector.multi_reduction <maximumf>, %113, %cst_47 [1] : vector<16x16xf32> to vector<16xf32>
    %115 = vector.shape_cast %114 : vector<16xf32> to vector<16x1xf32>
    %116 = vector.broadcast %115 : vector<16x1xf32> to vector<16x16xf32>
    %117 = arith.subf %113, %116 : vector<16x16xf32>
    %118 = math.exp %117 : vector<16x16xf32>
    %cst_48 = arith.constant dense<0.000000e+00> : vector<16xf32>
    %119 = vector.multi_reduction <add>, %118, %cst_48 [1] : vector<16x16xf32> to vector<16xf32>
    %120 = vector.shape_cast %119 : vector<16xf32> to vector<16x1xf32>
    %121 = tpu.reciprocal %120 {approx = true} : vector<16x1xf32> -> vector<16x1xf32>
    %122 = arith.mulf %120, %121 : vector<16x1xf32>
    %cst_49 = arith.constant 2.000000e+00 : f32
    %123 = vector.broadcast %cst_49 : f32 to vector<16x1xf32>
    %124 = arith.subf %123, %122 : vector<16x1xf32>
    %125 = arith.mulf %121, %124 : vector<16x1xf32>
    %126 = vector.broadcast %125 : vector<16x1xf32> to vector<16x16xf32>
    %127 = arith.mulf %118, %126 : vector<16x16xf32>
    %cst_50 = arith.constant dense<0.000000e+00> : vector<16x32xf32>
    %128 = tpu.matmul %127, %107, %cst_50 {dimension_numbers = #tpu.dot_dimension_numbers<[1], [0], [0], [1], [0, 0, 1, 1], [], []>} : vector<16x16xf32>, vector<16x32xf32>, vector<16x32xf32> -> vector<16x32xf32>
    %c0_51 = arith.constant 0 : index
    %c96 = arith.constant 96 : index
    %129 = vector.load %arg9[%c0_51, %c96] : memref<16x256xf32, #tpu.memory_space<vmem>>, vector<16x32xf32>
    tpu.vector_store %arg9[%c0_51, %c96], %128 {strides = array<i32>} : memref<16x256xf32, #tpu.memory_space<vmem>>, vector<16x32xf32>,
    %130 = vector.extract_strided_slice %29 {offsets = [0, 128], sizes = [16, 32], strides = [1, 1]} : vector<16x768xf32> to vector<16x32xf32>
    %131 = vector.extract_strided_slice %29 {offsets = [0, 384], sizes = [16, 32], strides = [1, 1]} : vector<16x768xf32> to vector<16x32xf32>
    %132 = vector.extract_strided_slice %29 {offsets = [0, 640], sizes = [16, 32], strides = [1, 1]} : vector<16x768xf32> to vector<16x32xf32>
    %cst_52 = arith.constant dense<0.000000e+00> : vector<16x16xf32>
    %133 = tpu.matmul %130, %131, %cst_52 {dimension_numbers = #tpu.dot_dimension_numbers<[1], [1], [0], [0], [0, 0, 1, 0], [], []>} : vector<16x32xf32>, vector<16x32xf32>, vector<16x16xf32> -> vector<16x16xf32>
    %cst_53 = arith.constant 0.176776692 : f32
    %134 = vector.broadcast %cst_53 : f32 to vector<16x16xf32>
    %135 = arith.mulf %133, %134 : vector<16x16xf32>
    %c4 = arith.constant 4 : index
    %c0_54 = arith.constant 0 : index
    %c0_55 = arith.constant 0 : index
    %136 = vector.load %arg7[%c4, %c0_54, %c0_55] : memref<8x16x16xf32, #tpu.memory_space<vmem>>, vector<1x16x16xf32>
    %137 = vector.shape_cast %136 : vector<1x16x16xf32> to vector<16x16xf32>
    %138 = arith.addf %135, %137 : vector<16x16xf32>
    %cst_56 = arith.constant dense<0xFF800000> : vector<16xf32>
    %139 = vector.multi_reduction <maximumf>, %138, %cst_56 [1] : vector<16x16xf32> to vector<16xf32>
    %140 = vector.shape_cast %139 : vector<16xf32> to vector<16x1xf32>
    %141 = vector.broadcast %140 : vector<16x1xf32> to vector<16x16xf32>
    %142 = arith.subf %138, %141 : vector<16x16xf32>
    %143 = math.exp %142 : vector<16x16xf32>
    %cst_57 = arith.constant dense<0.000000e+00> : vector<16xf32>
    %144 = vector.multi_reduction <add>, %143, %cst_57 [1] : vector<16x16xf32> to vector<16xf32>
    %145 = vector.shape_cast %144 : vector<16xf32> to vector<16x1xf32>
    %146 = tpu.reciprocal %145 {approx = true} : vector<16x1xf32> -> vector<16x1xf32>
    %147 = arith.mulf %145, %146 : vector<16x1xf32>
    %cst_58 = arith.constant 2.000000e+00 : f32
    %148 = vector.broadcast %cst_58 : f32 to vector<16x1xf32>
    %149 = arith.subf %148, %147 : vector<16x1xf32>
    %150 = arith.mulf %146, %149 : vector<16x1xf32>
    %151 = vector.broadcast %150 : vector<16x1xf32> to vector<16x16xf32>
    %152 = arith.mulf %143, %151 : vector<16x16xf32>
    %cst_59 = arith.constant dense<0.000000e+00> : vector<16x32xf32>
    %153 = tpu.matmul %152, %132, %cst_59 {dimension_numbers = #tpu.dot_dimension_numbers<[1], [0], [0], [1], [0, 0, 1, 1], [], []>} : vector<16x16xf32>, vector<16x32xf32>, vector<16x32xf32> -> vector<16x32xf32>
    %c0_60 = arith.constant 0 : index
    %c128 = arith.constant 128 : index
    %154 = vector.load %arg9[%c0_60, %c128] : memref<16x256xf32, #tpu.memory_space<vmem>>, vector<16x32xf32>
    tpu.vector_store %arg9[%c0_60, %c128], %153 {strides = array<i32>} : memref<16x256xf32, #tpu.memory_space<vmem>>, vector<16x32xf32>,
    %155 = vector.extract_strided_slice %29 {offsets = [0, 160], sizes = [16, 32], strides = [1, 1]} : vector<16x768xf32> to vector<16x32xf32>
    %156 = vector.extract_strided_slice %29 {offsets = [0, 416], sizes = [16, 32], strides = [1, 1]} : vector<16x768xf32> to vector<16x32xf32>
    %157 = vector.extract_strided_slice %29 {offsets = [0, 672], sizes = [16, 32], strides = [1, 1]} : vector<16x768xf32> to vector<16x32xf32>
    %cst_61 = arith.constant dense<0.000000e+00> : vector<16x16xf32>
    %158 = tpu.matmul %155, %156, %cst_61 {dimension_numbers = #tpu.dot_dimension_numbers<[1], [1], [0], [0], [0, 0, 1, 0], [], []>} : vector<16x32xf32>, vector<16x32xf32>, vector<16x16xf32> -> vector<16x16xf32>
    %cst_62 = arith.constant 0.176776692 : f32
    %159 = vector.broadcast %cst_62 : f32 to vector<16x16xf32>
    %160 = arith.mulf %158, %159 : vector<16x16xf32>
    %c5 = arith.constant 5 : index
    %c0_63 = arith.constant 0 : index
    %c0_64 = arith.constant 0 : index
    %161 = vector.load %arg7[%c5, %c0_63, %c0_64] : memref<8x16x16xf32, #tpu.memory_space<vmem>>, vector<1x16x16xf32>
    %162 = vector.shape_cast %161 : vector<1x16x16xf32> to vector<16x16xf32>
    %163 = arith.addf %160, %162 : vector<16x16xf32>
    %cst_65 = arith.constant dense<0xFF800000> : vector<16xf32>
    %164 = vector.multi_reduction <maximumf>, %163, %cst_65 [1] : vector<16x16xf32> to vector<16xf32>
    %165 = vector.shape_cast %164 : vector<16xf32> to vector<16x1xf32>
    %166 = vector.broadcast %165 : vector<16x1xf32> to vector<16x16xf32>
    %167 = arith.subf %163, %166 : vector<16x16xf32>
    %168 = math.exp %167 : vector<16x16xf32>
    %cst_66 = arith.constant dense<0.000000e+00> : vector<16xf32>
    %169 = vector.multi_reduction <add>, %168, %cst_66 [1] : vector<16x16xf32> to vector<16xf32>
    %170 = vector.shape_cast %169 : vector<16xf32> to vector<16x1xf32>
    %171 = tpu.reciprocal %170 {approx = true} : vector<16x1xf32> -> vector<16x1xf32>
    %172 = arith.mulf %170, %171 : vector<16x1xf32>
    %cst_67 = arith.constant 2.000000e+00 : f32
    %173 = vector.broadcast %cst_67 : f32 to vector<16x1xf32>
    %174 = arith.subf %173, %172 : vector<16x1xf32>
    %175 = arith.mulf %171, %174 : vector<16x1xf32>
    %176 = vector.broadcast %175 : vector<16x1xf32> to vector<16x16xf32>
    %177 = arith.mulf %168, %176 : vector<16x16xf32>
    %cst_68 = arith.constant dense<0.000000e+00> : vector<16x32xf32>
    %178 = tpu.matmul %177, %157, %cst_68 {dimension_numbers = #tpu.dot_dimension_numbers<[1], [0], [0], [1], [0, 0, 1, 1], [], []>} : vector<16x16xf32>, vector<16x32xf32>, vector<16x32xf32> -> vector<16x32xf32>
    %c0_69 = arith.constant 0 : index
    %c160 = arith.constant 160 : index
    %179 = vector.load %arg9[%c0_69, %c160] : memref<16x256xf32, #tpu.memory_space<vmem>>, vector<16x32xf32>
    tpu.vector_store %arg9[%c0_69, %c160], %178 {strides = array<i32>} : memref<16x256xf32, #tpu.memory_space<vmem>>, vector<16x32xf32>,
    %180 = vector.extract_strided_slice %29 {offsets = [0, 192], sizes = [16, 32], strides = [1, 1]} : vector<16x768xf32> to vector<16x32xf32>
    %181 = vector.extract_strided_slice %29 {offsets = [0, 448], sizes = [16, 32], strides = [1, 1]} : vector<16x768xf32> to vector<16x32xf32>
    %182 = vector.extract_strided_slice %29 {offsets = [0, 704], sizes = [16, 32], strides = [1, 1]} : vector<16x768xf32> to vector<16x32xf32>
    %cst_70 = arith.constant dense<0.000000e+00> : vector<16x16xf32>
    %183 = tpu.matmul %180, %181, %cst_70 {dimension_numbers = #tpu.dot_dimension_numbers<[1], [1], [0], [0], [0, 0, 1, 0], [], []>} : vector<16x32xf32>, vector<16x32xf32>, vector<16x16xf32> -> vector<16x16xf32>
    %cst_71 = arith.constant 0.176776692 : f32
    %184 = vector.broadcast %cst_71 : f32 to vector<16x16xf32>
    %185 = arith.mulf %183, %184 : vector<16x16xf32>
    %c6 = arith.constant 6 : index
    %c0_72 = arith.constant 0 : index
    %c0_73 = arith.constant 0 : index
    %186 = vector.load %arg7[%c6, %c0_72, %c0_73] : memref<8x16x16xf32, #tpu.memory_space<vmem>>, vector<1x16x16xf32>
    %187 = vector.shape_cast %186 : vector<1x16x16xf32> to vector<16x16xf32>
    %188 = arith.addf %185, %187 : vector<16x16xf32>
    %cst_74 = arith.constant dense<0xFF800000> : vector<16xf32>
    %189 = vector.multi_reduction <maximumf>, %188, %cst_74 [1] : vector<16x16xf32> to vector<16xf32>
    %190 = vector.shape_cast %189 : vector<16xf32> to vector<16x1xf32>
    %191 = vector.broadcast %190 : vector<16x1xf32> to vector<16x16xf32>
    %192 = arith.subf %188, %191 : vector<16x16xf32>
    %193 = math.exp %192 : vector<16x16xf32>
    %cst_75 = arith.constant dense<0.000000e+00> : vector<16xf32>
    %194 = vector.multi_reduction <add>, %193, %cst_75 [1] : vector<16x16xf32> to vector<16xf32>
    %195 = vector.shape_cast %194 : vector<16xf32> to vector<16x1xf32>
    %196 = tpu.reciprocal %195 {approx = true} : vector<16x1xf32> -> vector<16x1xf32>
    %197 = arith.mulf %195, %196 : vector<16x1xf32>
    %cst_76 = arith.constant 2.000000e+00 : f32
    %198 = vector.broadcast %cst_76 : f32 to vector<16x1xf32>
    %199 = arith.subf %198, %197 : vector<16x1xf32>
    %200 = arith.mulf %196, %199 : vector<16x1xf32>
    %201 = vector.broadcast %200 : vector<16x1xf32> to vector<16x16xf32>
    %202 = arith.mulf %193, %201 : vector<16x16xf32>
    %cst_77 = arith.constant dense<0.000000e+00> : vector<16x32xf32>
    %203 = tpu.matmul %202, %182, %cst_77 {dimension_numbers = #tpu.dot_dimension_numbers<[1], [0], [0], [1], [0, 0, 1, 1], [], []>} : vector<16x16xf32>, vector<16x32xf32>, vector<16x32xf32> -> vector<16x32xf32>
    %c0_78 = arith.constant 0 : index
    %c192 = arith.constant 192 : index
    %204 = vector.load %arg9[%c0_78, %c192] : memref<16x256xf32, #tpu.memory_space<vmem>>, vector<16x32xf32>
    tpu.vector_store %arg9[%c0_78, %c192], %203 {strides = array<i32>} : memref<16x256xf32, #tpu.memory_space<vmem>>, vector<16x32xf32>,
    %205 = vector.extract_strided_slice %29 {offsets = [0, 224], sizes = [16, 32], strides = [1, 1]} : vector<16x768xf32> to vector<16x32xf32>
    %206 = vector.extract_strided_slice %29 {offsets = [0, 480], sizes = [16, 32], strides = [1, 1]} : vector<16x768xf32> to vector<16x32xf32>
    %207 = vector.extract_strided_slice %29 {offsets = [0, 736], sizes = [16, 32], strides = [1, 1]} : vector<16x768xf32> to vector<16x32xf32>
    %cst_79 = arith.constant dense<0.000000e+00> : vector<16x16xf32>
    %208 = tpu.matmul %205, %206, %cst_79 {dimension_numbers = #tpu.dot_dimension_numbers<[1], [1], [0], [0], [0, 0, 1, 0], [], []>} : vector<16x32xf32>, vector<16x32xf32>, vector<16x16xf32> -> vector<16x16xf32>
    %cst_80 = arith.constant 0.176776692 : f32
    %209 = vector.broadcast %cst_80 : f32 to vector<16x16xf32>
    %210 = arith.mulf %208, %209 : vector<16x16xf32>
    %c7 = arith.constant 7 : index
    %c0_81 = arith.constant 0 : index
    %c0_82 = arith.constant 0 : index
    %211 = vector.load %arg7[%c7, %c0_81, %c0_82] : memref<8x16x16xf32, #tpu.memory_space<vmem>>, vector<1x16x16xf32>
    %212 = vector.shape_cast %211 : vector<1x16x16xf32> to vector<16x16xf32>
    %213 = arith.addf %210, %212 : vector<16x16xf32>
    %cst_83 = arith.constant dense<0xFF800000> : vector<16xf32>
    %214 = vector.multi_reduction <maximumf>, %213, %cst_83 [1] : vector<16x16xf32> to vector<16xf32>
    %215 = vector.shape_cast %214 : vector<16xf32> to vector<16x1xf32>
    %216 = vector.broadcast %215 : vector<16x1xf32> to vector<16x16xf32>
    %217 = arith.subf %213, %216 : vector<16x16xf32>
    %218 = math.exp %217 : vector<16x16xf32>
    %cst_84 = arith.constant dense<0.000000e+00> : vector<16xf32>
    %219 = vector.multi_reduction <add>, %218, %cst_84 [1] : vector<16x16xf32> to vector<16xf32>
    %220 = vector.shape_cast %219 : vector<16xf32> to vector<16x1xf32>
    %221 = tpu.reciprocal %220 {approx = true} : vector<16x1xf32> -> vector<16x1xf32>
    %222 = arith.mulf %220, %221 : vector<16x1xf32>
    %cst_85 = arith.constant 2.000000e+00 : f32
    %223 = vector.broadcast %cst_85 : f32 to vector<16x1xf32>
    %224 = arith.subf %223, %222 : vector<16x1xf32>
    %225 = arith.mulf %221, %224 : vector<16x1xf32>
    %226 = vector.broadcast %225 : vector<16x1xf32> to vector<16x16xf32>
    %227 = arith.mulf %218, %226 : vector<16x16xf32>
    %cst_86 = arith.constant dense<0.000000e+00> : vector<16x32xf32>
    %228 = tpu.matmul %227, %207, %cst_86 {dimension_numbers = #tpu.dot_dimension_numbers<[1], [0], [0], [1], [0, 0, 1, 1], [], []>} : vector<16x16xf32>, vector<16x32xf32>, vector<16x32xf32> -> vector<16x32xf32>
    %c0_87 = arith.constant 0 : index
    %c224 = arith.constant 224 : index
    %229 = vector.load %arg9[%c0_87, %c224] : memref<16x256xf32, #tpu.memory_space<vmem>>, vector<16x32xf32>
    tpu.vector_store %arg9[%c0_87, %c224], %228 {strides = array<i32>} : memref<16x256xf32, #tpu.memory_space<vmem>>, vector<16x32xf32>,
    %c0_88 = arith.constant 0 : index
    %c0_89 = arith.constant 0 : index
    %230 = vector.load %arg9[%c0_88, %c0_89] : memref<16x256xf32, #tpu.memory_space<vmem>>, vector<16x256xf32>
    %c0_90 = arith.constant 0 : index
    %c0_91 = arith.constant 0 : index
    %231 = vector.load %arg5[%c0_90, %c0_91] : memref<256x128xf32, #tpu.memory_space<vmem>>, vector<256x128xf32>
    %cst_92 = arith.constant dense<0.000000e+00> : vector<16x128xf32>
    %232 = tpu.matmul %230, %231, %cst_92 {dimension_numbers = #tpu.dot_dimension_numbers<[1], [0], [0], [1], [0, 0, 1, 1], [], []>} : vector<16x256xf32>, vector<256x128xf32>, vector<16x128xf32> -> vector<16x128xf32>
    %c0_93 = arith.constant 0 : index
    %c0_94 = arith.constant 0 : index
    %233 = vector.load %arg6[%c0_93, %c0_94] : memref<1x128xf32, #tpu.memory_space<vmem>>, vector<1x128xf32>
    %234 = vector.broadcast %233 : vector<1x128xf32> to vector<16x128xf32>
    %235 = arith.addf %232, %234 : vector<16x128xf32>
    %236 = arith.addf %1, %235 : vector<16x128xf32>
    %c0_95 = arith.constant 0 : index
    %c0_96 = arith.constant 0 : index
    %c0_97 = arith.constant 0 : index
    %237 = vector.load %arg8[%c0_95, %c0_96, %c0_97] : memref<1x16x128xf32, #tpu.memory_space<vmem>>, vector<1x16x128xf32>
    %238 = vector.shape_cast %237 : vector<1x16x128xf32> to vector<16x128xf32>
    %239 = vector.shape_cast %236 : vector<16x128xf32> to vector<1x16x128xf32>
    tpu.vector_store %arg8[%c0_95, %c0_96, %c0_97], %239 {strides = array<i32>} : memref<1x16x128xf32, #tpu.memory_space<vmem>>, vector<1x16x128xf32>,
    return
  }
  func.func @transform_0(%arg0: i32) -> (i32, i32, i32) {
    %c0_i32 = arith.constant 0 : i32
    %c0_i32_0 = arith.constant 0 : i32
    %c0_i32_1 = arith.constant 0 : i32
    return %arg0, %c0_i32, %c0_i32_0 : i32, i32, i32
  }
  func.func @transform_1(%arg0: i32) -> (i32, i32) {
    %c0_i32 = arith.constant 0 : i32
    %c0_i32_0 = arith.constant 0 : i32
    %c0_i32_1 = arith.constant 0 : i32
    return %c0_i32, %c0_i32_0 : i32, i32
  }
  func.func @transform_2(%arg0: i32) -> (i32, i32) {
    %c0_i32 = arith.constant 0 : i32
    %c0_i32_0 = arith.constant 0 : i32
    %c0_i32_1 = arith.constant 0 : i32
    return %c0_i32, %c0_i32_0 : i32, i32
  }
  func.func @transform_3(%arg0: i32) -> (i32, i32) {
    %c0_i32 = arith.constant 0 : i32
    %c0_i32_0 = arith.constant 0 : i32
    %c0_i32_1 = arith.constant 0 : i32
    return %c0_i32, %c0_i32_0 : i32, i32
  }
  func.func @transform_4(%arg0: i32) -> (i32, i32) {
    %c0_i32 = arith.constant 0 : i32
    %c0_i32_0 = arith.constant 0 : i32
    %c0_i32_1 = arith.constant 0 : i32
    return %c0_i32, %c0_i32_0 : i32, i32
  }
  func.func @transform_5(%arg0: i32) -> (i32, i32) {
    %c0_i32 = arith.constant 0 : i32
    %c0_i32_0 = arith.constant 0 : i32
    %c0_i32_1 = arith.constant 0 : i32
    return %c0_i32, %c0_i32_0 : i32, i32
  }
  func.func @transform_6(%arg0: i32) -> (i32, i32, i32) {
    %c0_i32 = arith.constant 0 : i32
    %c0_i32_0 = arith.constant 0 : i32
    %c0_i32_1 = arith.constant 0 : i32
    %c0_i32_2 = arith.constant 0 : i32
    return %c0_i32, %c0_i32_0, %c0_i32_1 : i32, i32, i32
  }
  func.func @transform_7(%arg0: i32) -> (i32, i32, i32) {
    %c0_i32 = arith.constant 0 : i32
    %c0_i32_0 = arith.constant 0 : i32
    %c0_i32_1 = arith.constant 0 : i32
    return %arg0, %c0_i32, %c0_i32_0 : i32, i32, i32
  }
}

</mosaic_0001>

<llo_original>
// kernel: transformer_forward.3
$region0: #{transformer_forward.3}
  #allocation0 [shape = 'u32[]', space=smem, size = 0x4, offset = 0x4, fixed_abs, tag = 'smem constant byte address 0x4 - core index']
  #allocation1 [shape = 'u32[72,128]{1,0:T(1,128)}', space=vmem, size = 0x9000, scoped, tag = 'internal scratch']
  #allocation2 [shape = 'f32[32,128]{1,0:T(8,128)}', space=vmem, size = 0x4000, scoped, tag = 'scratch operand']
  #allocation3 [shape = 'f32[32,128]{1,0:T(8,128)}', space=vmem, size = 0x4000, scoped, tag = 'scratch operand']
  %s0 = inlined_call_operand.vmem [shape: f32[32,128], index: 0, kind: input, shape index: {}]
  %s1 = inlined_call_operand.vmem [shape: f32[1,128], index: 1, kind: input, shape index: {}]
  %s2 = inlined_call_operand.vmem [shape: f32[1,128], index: 2, kind: input, shape index: {}]
  %s3 = inlined_call_operand.hbm [shape: f32[128,128], index: 3, kind: input, shape index: {}]
  %s4 = inlined_call_operand.vmem [shape: f32[1,128], index: 4, kind: input, shape index: {}]
  %s5 = inlined_call_operand.hbm [shape: f32[128,128], index: 5, kind: input, shape index: {}]
  %s6 = inlined_call_operand.vmem [shape: f32[1,128], index: 6, kind: input, shape index: {}]
  %s7 = inlined_call_operand.hbm [shape: f32[32,128], index: 7, kind: output, shape index: {}]
  %s8 = sld [smem:[#allocation0]]
  $region54: #{transformer_forward.3} parent=0
    _
  %s10 = ssub.s32 1, %s8
  %s11 = scalar_select 0, %s10, %s8
  $region1: #{transformer_forward.3} parent=0
    #allocation4 [shape = 'u8[65536]{0}', space=vmem, size = 0x10000, scoped, tag = 'input window, operand 3, single buffered']
    #allocation5 [shape = 's32[1]{0}', space=sflag, size = 0x4, scoped, tag = 'scoped memory for transformer_forward.3']
    #allocation6 [shape = 's32[1]{0}', space=sflag, size = 0x4, scoped, tag = 'scoped memory for transformer_forward.3']
    #allocation7 [shape = 'u8[65536]{0}', space=vmem, size = 0x10000, scoped, tag = 'input window, operand 5, single buffered']
    #allocation8 [shape = 's32[1]{0}', space=sflag, size = 0x4, scoped, tag = 'scoped memory for transformer_forward.3']
    #allocation9 [shape = 'u8[16384]{0}', space=vmem, size = 0x4000, scoped, tag = 'output window, operand 0, single buffered']
    %12 = vsyncpa [#allocation5], 0
    %13 = vsyncpa [#allocation8], 0
    %14 = vsyncpa [#allocation6], 0
    // Predicated region
    $region2: #{transformer_forward.3} parent=1 // pred_check
      _
    $region3: #{transformer_forward.3} parent=1 // pred_check_branch
      %16 = sbr.rel (0) target = $region5
    $region4: #{transformer_forward.3} parent=1 // pred_region
      _
    $region5: #{transformer_forward.3} parent=1 // pred_fallthru
      _
    // Predicated region
    $region6: #{transformer_forward.3} parent=1 // pred_check
      _
    $region7: #{transformer_forward.3} parent=1 // pred_check_branch
      %18 = sbr.rel (0) target = $region9
    $region8: #{transformer_forward.3} parent=1 // pred_region
      _
    $region9: #{transformer_forward.3} parent=1 // pred_fallthru
      _
    // Predicated region
    $region10: #{transformer_forward.3} parent=1 // pred_check
      _
    $region11: #{transformer_forward.3} parent=1 // pred_check_branch
      %20 = sbr.rel (0) target = $region13
    $region12: #{transformer_forward.3} parent=1 // pred_region
      _
    $region13: #{transformer_forward.3} parent=1 // pred_fallthru
      _
    // Predicated region
    $region14: #{transformer_forward.3} parent=1 // pred_check
      _
    $region15: #{transformer_forward.3} parent=1 // pred_check_branch
      %22 = sbr.rel (0) target = $region17
    $region16: #{transformer_forward.3} parent=1 // pred_region
      %24 = vsyncadd [#allocation5], 0
      %s25 = sshll.u32 %s3, 4
      %s26 = int_to_ptr.hbm [resolvable:$true] %s25
      %s27 = sshll.u32 [#allocation4], 4
      %s28 = int_to_ptr.vmem [resolvable:$true] %s27
      %33 = dma.hbm_to_vmem [thread:$0]  %s26, 2048, %s28, [#allocation5], 128, 128, 8
    $region17: #{transformer_forward.3} parent=1 // pred_fallthru
      _
    // Predicated region
    $region18: #{transformer_forward.3} parent=1 // pred_check
      _
    $region19: #{transformer_forward.3} parent=1 // pred_check_branch
      %35 = sbr.rel (0) target = $region21
    $region20: #{transformer_forward.3} parent=1 // pred_region
      _
    $region21: #{transformer_forward.3} parent=1 // pred_fallthru
      _
    // Predicated region
    $region22: #{transformer_forward.3} parent=1 // pred_check
      _
    $region23: #{transformer_forward.3} parent=1 // pred_check_branch
      %37 = sbr.rel (0) target = $region25
    $region24: #{transformer_forward.3} parent=1 // pred_region
      %39 = vsyncadd [#allocation8], 0
      %s40 = sshll.u32 %s5, 4
      %s41 = int_to_ptr.hbm [resolvable:$true] %s40
      %s42 = sshll.u32 [#allocation7], 4
      %s43 = int_to_ptr.vmem [resolvable:$true] %s42
      %48 = dma.hbm_to_vmem [thread:$0]  %s41, 2048, %s43, [#allocation8], 128, 128, 8
    $region25: #{transformer_forward.3} parent=1 // pred_fallthru
      _
    // Predicated region
    $region26: #{transformer_forward.3} parent=1 // pred_check
      _
    $region27: #{transformer_forward.3} parent=1 // pred_check_branch
      %50 = sbr.rel (0) target = $region29
    $region28: #{transformer_forward.3} parent=1 // pred_region
      _
    $region29: #{transformer_forward.3} parent=1 // pred_fallthru
      _
    // Predicated region
    $region30: #{transformer_forward.3} parent=1 // pred_check
      _
    $region31: #{transformer_forward.3} parent=1 // pred_check_branch
      %52 = sbr.rel (0) target = $region33
    $region32: #{transformer_forward.3} parent=1 // pred_region
      %54 = dma.done [#allocation5], 2048
    $region33: #{transformer_forward.3} parent=1 // pred_fallthru
      _
    // Predicated region
    $region34: #{transformer_forward.3} parent=1 // pred_check
      _
    $region35: #{transformer_forward.3} parent=1 // pred_check_branch
      %56 = sbr.rel (0) target = $region37
    $region36: #{transformer_forward.3} parent=1 // pred_region
      %58 = dma.done [#allocation8], 2048
    $region37: #{transformer_forward.3} parent=1 // pred_fallthru
      _
    %p59 = scmp.eq.s32.totalorder 0, 0
    // Predicated region
    $region38: #{transformer_forward.3} parent=1 // pred_check
      %p60 = pneg %p59
    $region39: #{transformer_forward.3} parent=1 // pred_check_branch
      %62 = sbr.rel (%p60) target = $region41
    $region40: #{transformer_forward.3} parent=1 // pred_region
      %v63 = vld [vmem:[%s0] sm:$0xff]
      %v64 = vld [vmem:[%s0 + $0x8] sm:$0xff]
      %v65 = vld [vmem:[%s0 + $0x10] sm:$0xff]
      %v66 = vld [vmem:[%s0 + $0x18] sm:$0xff]
      %67 = vadd.xlane.f32.xlu0 %v63
      %v68 = vpop.xlane.xlu0 %67
      %69 = vadd.xlane.f32.xlu0 %v64
      %v70 = vpop.xlane.xlu0 %69
      %71 = vadd.xlane.f32.xlu0 %v65
      %v72 = vpop.xlane.xlu0 %71
      %73 = vadd.xlane.f32.xlu0 %v66
      %v74 = vpop.xlane.xlu0 %73
      %v75 = vmul.f32 %v68, 0.03125
      %v76 = vmul.f32 %v70, 0.03125
      %v77 = vmul.f32 %v72, 0.03125
      %v78 = vmul.f32 %v74, 0.03125
      %v79 = vmul.f32 %v63, %v63
      %v80 = vmul.f32 %v64, %v64
      %v81 = vmul.f32 %v65, %v65
      %v82 = vmul.f32 %v66, %v66
      %83 = vadd.xlane.f32.xlu0 %v79
      %v84 = vpop.xlane.xlu0 %83
      %85 = vadd.xlane.f32.xlu0 %v80
      %v86 = vpop.xlane.xlu0 %85
      %87 = vadd.xlane.f32.xlu0 %v81
      %v88 = vpop.xlane.xlu0 %87
      %89 = vadd.xlane.f32.xlu0 %v82
      %v90 = vpop.xlane.xlu0 %89
      %v91 = vmul.f32 %v84, 0.03125
      %v92 = vmul.f32 %v86, 0.03125
      %v93 = vmul.f32 %v88, 0.03125
      %v94 = vmul.f32 %v90, 0.03125
      %v95 = vmul.f32 %v75, %v75
      %v96 = vmul.f32 %v76, %v76
      %v97 = vmul.f32 %v77, %v77
      %v98 = vmul.f32 %v78, %v78
      %v99 = vsub.f32 %v91, %v95
      %v100 = vsub.f32 %v92, %v96
      %v101 = vsub.f32 %v93, %v97
      %v102 = vsub.f32 %v94, %v98
      %v103 = vmax.f32 %v99, 0.0
      %v104 = vmax.f32 %v100, 0.0
      %v105 = vmax.f32 %v101, 0.0
      %v106 = vmax.f32 %v102, 0.0
      %v107 = vsub.f32 %v63, %v75
      %v108 = vsub.f32 %v64, %v76
      %v109 = vsub.f32 %v65, %v77
      %v110 = vsub.f32 %v66, %v78
      %v111 = vadd.f32 %v103, 1e-05
      %v112 = vadd.f32 %v104, 1e-05
      %v113 = vadd.f32 %v105, 1e-05
      %v114 = vadd.f32 %v106, 1e-05
      %v115 = vrsqrt.pop %v111
      %v116 = vmul.f32 %v115, %v111
      %v117 = vmul.f32 %v116, %v115
      %v118 = vmul.f32 0.5, %v117
      %v119 = vsub.f32 1.5, %v118
      %v120 = vmul.f32 %v115, %v119
      %vm121 = vweird.f32 %v111
      %vm122 = vweird.f32 %v115
      %vm123 = vmor %vm121, %vm122
      %v124 = vsel %vm123, %v115, %v120
      %v125 = vrsqrt.pop %v112
      %v126 = vmul.f32 %v125, %v112
      %v127 = vmul.f32 %v126, %v125
      %v128 = vmul.f32 0.5, %v127
      %v129 = vsub.f32 1.5, %v128
      %v130 = vmul.f32 %v125, %v129
      %vm131 = vweird.f32 %v112
      %vm132 = vweird.f32 %v125
      %vm133 = vmor %vm131, %vm132
      %v134 = vsel %vm133, %v125, %v130
      %v135 = vrsqrt.pop %v113
      %v136 = vmul.f32 %v135, %v113
      %v137 = vmul.f32 %v136, %v135
      %v138 = vmul.f32 0.5, %v137
      %v139 = vsub.f32 1.5, %v138
      %v140 = vmul.f32 %v135, %v139
      %vm141 = vweird.f32 %v113
      %vm142 = vweird.f32 %v135
      %vm143 = vmor %vm141, %vm142
      %v144 = vsel %vm143, %v135, %v140
      %v145 = vrsqrt.pop %v114
      %v146 = vmul.f32 %v145, %v114
      %v147 = vmul.f32 %v146, %v145
      %v148 = vmul.f32 0.5, %v147
      %v149 = vsub.f32 1.5, %v148
      %v150 = vmul.f32 %v145, %v149
      %vm151 = vweird.f32 %v114
      %vm152 = vweird.f32 %v145
      %vm153 = vmor %vm151, %vm152
      %v154 = vsel %vm153, %v145, %v150
      %v155 = vmul.f32 %v107, %v124
      %v156 = vmul.f32 %v108, %v134
      %v157 = vmul.f32 %v109, %v144
      %v158 = vmul.f32 %v110, %v154
      %v159 = vld [vmem:[%s1] sm:$0x1]
      %v161 = vperm.slane %v159, 0
      %v163 = vmul.f32 %v155, %v161
      %v164 = vmul.f32 %v156, %v161
      %v165 = vmul.f32 %v157, %v161
      %v166 = vmul.f32 %v158, %v161
      %v167 = vld [vmem:[%s2] sm:$0x1]
      %v169 = vperm.slane %v167, 0
      %v171 = vadd.f32 %v163, %v169
      %v172 = vadd.f32 %v164, %v169
      %v173 = vadd.f32 %v165, %v169
      %v174 = vadd.f32 %v166, %v169
      %175 = vst [vmem:[#allocation2] sm:$0xff] %v171
      %176 = vst [vmem:[#allocation2 + $0x8] sm:$0xff] %v172
      %177 = vst [vmem:[#allocation2 + $0x10] sm:$0xff] %v173
      %178 = vst [vmem:[#allocation2 + $0x18] sm:$0xff] %v174
      %179 = vst [vmem:[#allocation3] sm:$0xff] 0.0
      %180 = vst [vmem:[#allocation3 + $0x8] sm:$0xff] 0.0
      %181 = vst [vmem:[#allocation3 + $0x10] sm:$0xff] 0.0
      %182 = vst [vmem:[#allocation3 + $0x18] sm:$0xff] 0.0
    $region41: #{transformer_forward.3} parent=1 // pred_fallthru
      _
    %v183 = vld [vmem:[#allocation2] sm:$0xff]
    %v184 = vld [vmem:[#allocation2 + $0x8] sm:$0xff]
    %v185 = vld [vmem:[#allocation2 + $0x10] sm:$0xff]
    %v186 = vld [vmem:[#allocation2 + $0x18] sm:$0xff]
    %v187 = vld [vmem:[#allocation4] sm:$0xff]
    %v188 = vld [vmem:[#allocation4 + $0x8] sm:$0xff]
    %v189 = vld [vmem:[#allocation4 + $0x10] sm:$0xff]
    %v190 = vld [vmem:[#allocation4 + $0x18] sm:$0xff]
    %v191 = vld [vmem:[#allocation4 + $0x20] sm:$0xff]
    %v192 = vld [vmem:[#allocation4 + $0x28] sm:$0xff]
    %v193 = vld [vmem:[#allocation4 + $0x30] sm:$0xff]
    %v194 = vld [vmem:[#allocation4 + $0x38] sm:$0xff]
    %v195 = vld [vmem:[#allocation4 + $0x40] sm:$0xff]
    %v196 = vld [vmem:[#allocation4 + $0x48] sm:$0xff]
    %v197 = vld [vmem:[#allocation4 + $0x50] sm:$0xff]
    %v198 = vld [vmem:[#allocation4 + $0x58] sm:$0xff]
    %v199 = vld [vmem:[#allocation4 + $0x60] sm:$0xff]
    %v200 = vld [vmem:[#allocation4 + $0x68] sm:$0xff]
    %v201 = vld [vmem:[#allocation4 + $0x70] sm:$0xff]
    %v202 = vld [vmem:[#allocation4 + $0x78] sm:$0xff]
    %v203 = vld [vmem:[%s4] sm:$0x1]
    %v205 = vperm.slane %v203, 0
    %207 = vmatpush.msra.mxu0 %v202
    %208 = vmatpush.msra.mxu0 %v201
    %209 = vmatpush.msra.mxu0 %v200
    %210 = vmatpush.msra.mxu0 %v199
    %211 = vmatpush.msra.mxu0 %v198
    %212 = vmatpush.msra.mxu0 %v197
    %213 = vmatpush.msra.mxu0 %v196
    %214 = vmatpush.msra.mxu0 %v195
    %215 = vmatpush.msra.mxu0 %v194
    %216 = vmatpush.msra.mxu0 %v193
    %217 = vmatpush.msra.mxu0 %v192
    %218 = vmatpush.msra.mxu0 %v191
    %219 = vmatpush.msra.mxu0 %v190
    %220 = vmatpush.msra.mxu0 %v189
    %221 = vmatpush.msra.mxu0 %v188
    %222 = vmatpush.msra.mxu0 %v187
    %223 = vmatmul.f32.gmra.mxu0 %v183
    %v224 = vpop.f32.mrf.mxu0
    %v225 = vadd.f32 %v205, %v224
    %226 = vmatmul.f32.gmra.mxu0 %v184
    %v227 = vpop.f32.mrf.mxu0
    %v228 = vadd.f32 %v205, %v227
    %229 = vmatmul.f32.gmra.mxu0 %v185
    %v230 = vpop.f32.mrf.mxu0
    %v231 = vadd.f32 %v205, %v230
    %232 = vmatmul.f32.gmra.mxu0 %v186
    %v233 = vpop.f32.mrf.mxu0
    %v234 = vadd.f32 %v205, %v233
    %235 = vdwg.mxu0
    %v236 = vmin.f32 %v225, 20.0
    %v237 = vmin.f32 %v228, 20.0
    %v238 = vmin.f32 %v231, 20.0
    %v239 = vmin.f32 %v234, 20.0
    %v240 = vmul.f32 %v236, 1.442695
    %v241 = vpow.pop %v240
    %v242 = vmul.f32 %v237, 1.442695
    %v243 = vpow.pop %v242
    %v244 = vmul.f32 %v238, 1.442695
    %v245 = vpow.pop %v244
    %v246 = vmul.f32 %v239, 1.442695
    %v247 = vpow.pop %v246
    %v248 = vadd.f32 %v241, 2.0
    %v249 = vadd.f32 %v243, 2.0
    %v250 = vadd.f32 %v245, 2.0
    %v251 = vadd.f32 %v247, 2.0
    %v252 = vmul.f32 %v241, %v248
    %v253 = vmul.f32 %v243, %v249
    %v254 = vmul.f32 %v245, %v250
    %v255 = vmul.f32 %v247, %v251
    %vm256 = vcmp.gt.f32.partialorder %v225, 20.0
    %vm257 = vcmp.gt.f32.partialorder %v228, 20.0
    %vm258 = vcmp.gt.f32.partialorder %v231, 20.0
    %vm259 = vcmp.gt.f32.partialorder %v234, 20.0
    %v260 = vmul.f32 %v225, %v252
    %v261 = vmul.f32 %v228, %v253
    %v262 = vmul.f32 %v231, %v254
    %v263 = vmul.f32 %v234, %v255
    %v264 = vadd.f32 %v252, 2.0
    %v265 = vadd.f32 %v253, 2.0
    %v266 = vadd.f32 %v254, 2.0
    %v267 = vadd.f32 %v255, 2.0
    %v268 = vrcp.pop %v264
    %v269 = vrcp.pop %v265
    %v270 = vrcp.pop %v266
    %v271 = vrcp.pop %v267
    %v272 = vmul.f32 %v264, %v268
    %v273 = vmul.f32 %v265, %v269
    %v274 = vmul.f32 %v266, %v270
    %v275 = vmul.f32 %v267, %v271
    %v276 = vsub.f32 2.0, %v272
    %v277 = vsub.f32 2.0, %v273
    %v278 = vsub.f32 2.0, %v274
    %v279 = vsub.f32 2.0, %v275
    %v280 = vmul.f32 %v268, %v276
    %v281 = vmul.f32 %v269, %v277
    %v282 = vmul.f32 %v270, %v278
    %v283 = vmul.f32 %v271, %v279
    %v284 = vmul.f32 %v260, %v280
    %v285 = vmul.f32 %v261, %v281
    %v286 = vmul.f32 %v262, %v282
    %v287 = vmul.f32 %v263, %v283
    %v288 = vsel %vm256, %v225, %v284
    %v289 = vsel %vm257, %v228, %v285
    %v290 = vsel %vm258, %v231, %v286
    %v291 = vsel %vm259, %v234, %v287
    %v292 = vld [vmem:[#allocation3] sm:$0xff]
    %v293 = vld [vmem:[#allocation3 + $0x8] sm:$0xff]
    %v294 = vld [vmem:[#allocation3 + $0x10] sm:$0xff]
    %v295 = vld [vmem:[#allocation3 + $0x18] sm:$0xff]
    %v296 = vld [vmem:[#allocation7] sm:$0xff]
    %v297 = vld [vmem:[#allocation7 + $0x8] sm:$0xff]
    %v298 = vld [vmem:[#allocation7 + $0x10] sm:$0xff]
    %v299 = vld [vmem:[#allocation7 + $0x18] sm:$0xff]
    %v300 = vld [vmem:[#allocation7 + $0x20] sm:$0xff]
    %v301 = vld [vmem:[#allocation7 + $0x28] sm:$0xff]
    %v302 = vld [vmem:[#allocation7 + $0x30] sm:$0xff]
    %v303 = vld [vmem:[#allocation7 + $0x38] sm:$0xff]
    %v304 = vld [vmem:[#allocation7 + $0x40] sm:$0xff]
    %v305 = vld [vmem:[#allocation7 + $0x48] sm:$0xff]
    %v306 = vld [vmem:[#allocation7 + $0x50] sm:$0xff]
    %v307 = vld [vmem:[#allocation7 + $0x58] sm:$0xff]
    %v308 = vld [vmem:[#allocation7 + $0x60] sm:$0xff]
    %v309 = vld [vmem:[#allocation7 + $0x68] sm:$0xff]
    %v310 = vld [vmem:[#allocation7 + $0x70] sm:$0xff]
    %v311 = vld [vmem:[#allocation7 + $0x78] sm:$0xff]
    %312 = vmatpush.msra.mxu0 %v311
    %313 = vmatpush.msra.mxu0 %v310
    %314 = vmatpush.msra.mxu0 %v309
    %315 = vmatpush.msra.mxu0 %v308
    %316 = vmatpush.msra.mxu0 %v307
    %317 = vmatpush.msra.mxu0 %v306
    %318 = vmatpush.msra.mxu0 %v305
    %319 = vmatpush.msra.mxu0 %v304
    %320 = vmatpush.msra.mxu0 %v303
    %321 = vmatpush.msra.mxu0 %v302
    %322 = vmatpush.msra.mxu0 %v301
    %323 = vmatpush.msra.mxu0 %v300
    %324 = vmatpush.msra.mxu0 %v299
    %325 = vmatpush.msra.mxu0 %v298
    %326 = vmatpush.msra.mxu0 %v297
    %327 = vmatpush.msra.mxu0 %v296
    %328 = vmatmul.f32.gmra.mxu0 %v288
    %v329 = vpop.f32.mrf.mxu0
    %v330 = vadd.f32 0.0, %v329
    %331 = vmatmul.f32.gmra.mxu0 %v289
    %v332 = vpop.f32.mrf.mxu0
    %v333 = vadd.f32 0.0, %v332
    %334 = vmatmul.f32.gmra.mxu0 %v290
    %v335 = vpop.f32.mrf.mxu0
    %v336 = vadd.f32 0.0, %v335
    %337 = vmatmul.f32.gmra.mxu0 %v291
    %v338 = vpop.f32.mrf.mxu0
    %v339 = vadd.f32 0.0, %v338
    %340 = vdwg.mxu0
    %v341 = vadd.f32 %v292, %v330
    %v342 = vadd.f32 %v293, %v333
    %v343 = vadd.f32 %v294, %v336
    %v344 = vadd.f32 %v295, %v339
    %345 = vst [vmem:[#allocation3] sm:$0xff] %v341
    %346 = vst [vmem:[#allocation3 + $0x8] sm:$0xff] %v342
    %347 = vst [vmem:[#allocation3 + $0x10] sm:$0xff] %v343
    %348 = vst [vmem:[#allocation3 + $0x18] sm:$0xff] %v344
    // Predicated region
    $region42: #{transformer_forward.3} parent=1 // pred_check
      %p349 = pneg %p59
    $region43: #{transformer_forward.3} parent=1 // pred_check_branch
      %351 = sbr.rel (%p349) target = $region45
    $region44: #{transformer_forward.3} parent=1 // pred_region
      %v352 = vld [vmem:[#allocation3] sm:$0xff]
      %v353 = vld [vmem:[#allocation3 + $0x8] sm:$0xff]
      %v354 = vld [vmem:[#allocation3 + $0x10] sm:$0xff]
      %v355 = vld [vmem:[#allocation3 + $0x18] sm:$0xff]
      %v356 = vld [vmem:[%s6] sm:$0x1]
      %v358 = vperm.slane %v356, 0
      %v360 = vadd.f32 %v352, %v358
      %v361 = vadd.f32 %v353, %v358
      %v362 = vadd.f32 %v354, %v358
      %v363 = vadd.f32 %v355, %v358
      %v364 = vld [vmem:[%s0] sm:$0xff]
      %v365 = vld [vmem:[%s0 + $0x8] sm:$0xff]
      %v366 = vld [vmem:[%s0 + $0x10] sm:$0xff]
      %v367 = vld [vmem:[%s0 + $0x18] sm:$0xff]
      %v368 = vadd.f32 %v360, %v364
      %v369 = vadd.f32 %v361, %v365
      %v370 = vadd.f32 %v362, %v366
      %v371 = vadd.f32 %v363, %v367
      %372 = vst [vmem:[#allocation9] sm:$0xff] %v368
      %373 = vst [vmem:[#allocation9 + $0x8] sm:$0xff] %v369
      %374 = vst [vmem:[#allocation9 + $0x10] sm:$0xff] %v370
      %375 = vst [vmem:[#allocation9 + $0x18] sm:$0xff] %v371
    $region45: #{transformer_forward.3} parent=1 // pred_fallthru
      _
    // Predicated region
    $region46: #{transformer_forward.3} parent=1 // pred_check
      _
    $region47: #{transformer_forward.3} parent=1 // pred_check_branch
      %377 = sbr.rel (0) target = $region49
    $region48: #{transformer_forward.3} parent=1 // pred_region
      %379 = vsyncadd [#allocation6], 0
      %s380 = sshll.u32 [#allocation9], 4
      %s381 = int_to_ptr.vmem [resolvable:$true] %s380
      %s382 = sshll.u32 %s7, 4
      %s383 = int_to_ptr.hbm [resolvable:$true] %s382
      %388 = dma.vmem_to_hbm [thread:$0]  %s381, 512, %s383, [#allocation6], 128, 128, 8
    $region49: #{transformer_forward.3} parent=1 // pred_fallthru
      _
    // Predicated region
    $region50: #{transformer_forward.3} parent=1 // pred_check
      _
    $region51: #{transformer_forward.3} parent=1 // pred_check_branch
      %390 = sbr.rel (0) target = $region53
    $region52: #{transformer_forward.3} parent=1 // pred_region
      %392 = dma.done [#allocation6], 512
    $region53: #{transformer_forward.3} parent=1 // pred_fallthru
      _
    %393 = vsyncpa [#allocation5], 1
    %394 = vsyncpa [#allocation8], 1
    %395 = vsyncpa [#allocation6], 1

// kernel: transformer_forward.2
$region0: #{transformer_forward.2}
  #allocation0 [shape = 'u32[]', space=smem, size = 0x4, offset = 0x4, fixed_abs, tag = 'smem constant byte address 0x4 - core index']
  #allocation1 [shape = 'u32[72,128]{1,0:T(1,128)}', space=vmem, size = 0x9000, scoped, tag = 'internal scratch']
  #allocation2 [shape = 'f32[16,256]{1,0:T(8,128)}', space=vmem, size = 0x4000, scoped, tag = 'scratch operand']
  %s0 = inlined_call_operand.vmem [shape: f32[2,16,128], index: 0, kind: input, shape index: {}]
  %s1 = inlined_call_operand.vmem [shape: f32[1,128], index: 1, kind: input, shape index: {}]
  %s2 = inlined_call_operand.vmem [shape: f32[1,128], index: 2, kind: input, shape index: {}]
  %s3 = inlined_call_operand.hbm [shape: f32[128,768], index: 3, kind: input, shape index: {}]
  %s4 = inlined_call_operand.hbm [shape: f32[256,128], index: 4, kind: input, shape index: {}]
  %s5 = inlined_call_operand.vmem [shape: f32[1,128], index: 5, kind: input, shape index: {}]
  %s6 = inlined_call_operand.hbm [shape: f32[8,16,16], index: 6, kind: input, shape index: {}]
  %s7 = inlined_call_operand.vmem [shape: f32[2,16,128], index: 7, kind: output, shape index: {}]
  %s8 = sld [smem:[#allocation0]]
  $region73: #{transformer_forward.2} parent=0
    _
  %s10 = ssub.s32 1, %s8
  %s11 = scalar_select 0, %s10, %s8
  $region1: #{transformer_forward.2} parent=0
    #allocation3 [shape = 'u8[393216]{0}', space=vmem, size = 0x60000, scoped, tag = 'input window, operand 3, single buffered']
    #allocation4 [shape = 's32[2]{0}', space=sflag, size = 0x8, scoped, tag = 'scoped memory for transformer_forward.2']
    #allocation5 [shape = 'u8[131072]{0}', space=vmem, size = 0x20000, scoped, tag = 'input window, operand 4, single buffered']
    #allocation6 [shape = 's32[1]{0}', space=sflag, size = 0x4, scoped, tag = 'scoped memory for transformer_forward.2']
    #allocation7 [shape = 'u8[65536]{0}', space=vmem, size = 0x10000, scoped, tag = 'input window, operand 6, single buffered']
    %12 = vsyncpa [#allocation4], 0
    %13 = vsyncpa [#allocation6], 0
    loop: start=0, step=1, limit=4
    $region2: #{transformer_forward.2} parent=1 // loop_pre_header
      _
    $region3: #{transformer_forward.2} parent=1 // loop_header
      %s15 = sphi 0, %s19
      %p16 = scmp.ge.s32.totalorder %s15, 4
      %s25 = sphi 0, %s27
      %s28 = sphi 0, %s25
      %s29 = sphi 0, %s28
      %s45 = sphi 0, %s29
      %s49 = sphi 0, %s49
      %s51 = sphi 0, %s49
      %s52 = sphi 0, %s51
      %s66 = sphi 0, %s52
      %s70 = sphi 0, %s70
      %s72 = sphi 0, %s70
      %s73 = sphi 0, %s72
      %s87 = sphi 0, %s73
      %s91 = sphi 0, %s91
      %s93 = sphi 0, %s91
      %s94 = sphi 0, %s93
      %s108 = sphi 0, %s94
      %s112 = sphi 0, %s112
      %s114 = sphi 0, %s112
      %s115 = sphi 0, %s114
      %s129 = sphi 0, %s115
      %s133 = sphi 0, %s133
      %s135 = sphi 0, %s133
      %s136 = sphi 0, %s135
      %s150 = sphi 0, %s136
      %s154 = sphi 0, %s154
      %s156 = sphi 0, %s154
      %s157 = sphi 0, %s156
      %s171 = sphi 0, %s157
      %s177 = sphi 0, %s179
      %s180 = sphi 0, %s177
      %s181 = sphi 0, %s180
      %s197 = sphi 0, %s181
    $region4: #{transformer_forward.2} parent=1 // loop_header_branch
      %18 = sbr.rel (%p16) target = $region8
    $region5: #{transformer_forward.2} parent=1 // loop_body
      %s20 = ssub.s32 %s15, 1
      %s21 = ssub.s32 %s15, 2
      %s22 = sadd.s32 %s15, 1
      %s23 = ssub.s32 %s15, %s22
      %p24 = scmp.eq.s32.totalorder %s23, 0
      %s26 = sadd.s32 %s25, 1
      %s27 = scalar_select %p24, %s25, %s26
      %p30 = pneg %p24
      %p31 = scmp.eq.s32.totalorder %s15, 1
      %p32 = por %p30, %p31
      %p33 = scmp.ne.s32.totalorder %s25, %s28
      %p34 = scmp.eq.s32.totalorder %s15, 0
      %p35 = por %p33, %p34
      %p36 = scmp.ne.s32.totalorder %s25, %s28
      %p37 = scmp.eq.s32.totalorder %s20, 1
      %p38 = por %p36, %p37
      %p39 = scmp.ne.s32.totalorder %s28, %s29
      %p40 = scmp.eq.s32.totalorder %s20, 0
      %p41 = por %p39, %p40
      %p42 = scmp.ne.s32.totalorder %s28, %s29
      %p43 = scmp.eq.s32.totalorder %s21, 1
      %p44 = por %p42, %p43
      %p46 = scmp.ne.s32.totalorder %s29, %s45
      %p47 = scmp.eq.s32.totalorder %s21, 0
      %p48 = por %p46, %p47
      %s50 = sadd.s32 %s49, 1
      %p53 = scmp.eq.s32.totalorder %s15, 1
      %p54 = scmp.ne.s32.totalorder %s49, %s51
      %p55 = scmp.eq.s32.totalorder %s15, 0
      %p56 = por %p54, %p55
      %p57 = scmp.ne.s32.totalorder %s49, %s51
      %p58 = scmp.eq.s32.totalorder %s20, 1
      %p59 = por %p57, %p58
      %p60 = scmp.ne.s32.totalorder %s51, %s52
      %p61 = scmp.eq.s32.totalorder %s20, 0
      %p62 = por %p60, %p61
      %p63 = scmp.ne.s32.totalorder %s51, %s52
      %p64 = scmp.eq.s32.totalorder %s21, 1
      %p65 = por %p63, %p64
      %p67 = scmp.ne.s32.totalorder %s52, %s66
      %p68 = scmp.eq.s32.totalorder %s21, 0
      %p69 = por %p67, %p68
      %s71 = sadd.s32 %s70, 1
      %p74 = scmp.eq.s32.totalorder %s15, 1
      %p75 = scmp.ne.s32.totalorder %s70, %s72
      %p76 = scmp.eq.s32.totalorder %s15, 0
      %p77 = por %p75, %p76
      %p78 = scmp.ne.s32.totalorder %s70, %s72
      %p79 = scmp.eq.s32.totalorder %s20, 1
      %p80 = por %p78, %p79
      %p81 = scmp.ne.s32.totalorder %s72, %s73
      %p82 = scmp.eq.s32.totalorder %s20, 0
      %p83 = por %p81, %p82
      %p84 = scmp.ne.s32.totalorder %s72, %s73
      %p85 = scmp.eq.s32.totalorder %s21, 1
      %p86 = por %p84, %p85
      %p88 = scmp.ne.s32.totalorder %s73, %s87
      %p89 = scmp.eq.s32.totalorder %s21, 0
      %p90 = por %p88, %p89
      %s92 = sadd.s32 %s91, 1
      %p95 = scmp.eq.s32.totalorder %s15, 1
      %p96 = scmp.ne.s32.totalorder %s91, %s93
      %p97 = scmp.eq.s32.totalorder %s15, 0
      %p98 = por %p96, %p97
      %p99 = scmp.ne.s32.totalorder %s91, %s93
      %p100 = scmp.eq.s32.totalorder %s20, 1
      %p101 = por %p99, %p100
      %p102 = scmp.ne.s32.totalorder %s93, %s94
      %p103 = scmp.eq.s32.totalorder %s20, 0
      %p104 = por %p102, %p103
      %p105 = scmp.ne.s32.totalorder %s93, %s94
      %p106 = scmp.eq.s32.totalorder %s21, 1
      %p107 = por %p105, %p106
      %p109 = scmp.ne.s32.totalorder %s94, %s108
      %p110 = scmp.eq.s32.totalorder %s21, 0
      %p111 = por %p109, %p110
      %s113 = sadd.s32 %s112, 1
      %p116 = scmp.eq.s32.totalorder %s15, 1
      %p117 = scmp.ne.s32.totalorder %s112, %s114
      %p118 = scmp.eq.s32.totalorder %s15, 0
      %p119 = por %p117, %p118
      %p120 = scmp.ne.s32.totalorder %s112, %s114
      %p121 = scmp.eq.s32.totalorder %s20, 1
      %p122 = por %p120, %p121
      %p123 = scmp.ne.s32.totalorder %s114, %s115
      %p124 = scmp.eq.s32.totalorder %s20, 0
      %p125 = por %p123, %p124
      %p126 = scmp.ne.s32.totalorder %s114, %s115
      %p127 = scmp.eq.s32.totalorder %s21, 1
      %p128 = por %p126, %p127
      %p130 = scmp.ne.s32.totalorder %s115, %s129
      %p131 = scmp.eq.s32.totalorder %s21, 0
      %p132 = por %p130, %p131
      %s134 = sadd.s32 %s133, 1
      %p137 = scmp.eq.s32.totalorder %s15, 1
      %p138 = scmp.ne.s32.totalorder %s133, %s135
      %p139 = scmp.eq.s32.totalorder %s15, 0
      %p140 = por %p138, %p139
      %p141 = scmp.ne.s32.totalorder %s133, %s135
      %p142 = scmp.eq.s32.totalorder %s20, 1
      %p143 = por %p141, %p142
      %p144 = scmp.ne.s32.totalorder %s135, %s136
      %p145 = scmp.eq.s32.totalorder %s20, 0
      %p146 = por %p144, %p145
      %p147 = scmp.ne.s32.totalorder %s135, %s136
      %p148 = scmp.eq.s32.totalorder %s21, 1
      %p149 = por %p147, %p148
      %p151 = scmp.ne.s32.totalorder %s136, %s150
      %p152 = scmp.eq.s32.totalorder %s21, 0
      %p153 = por %p151, %p152
      %s155 = sadd.s32 %s154, 1
      %p158 = scmp.eq.s32.totalorder %s15, 1
      %p159 = scmp.ne.s32.totalorder %s154, %s156
      %p160 = scmp.eq.s32.totalorder %s15, 0
      %p161 = por %p159, %p160
      %p162 = scmp.ne.s32.totalorder %s154, %s156
      %p163 = scmp.eq.s32.totalorder %s20, 1
      %p164 = por %p162, %p163
      %p165 = scmp.ne.s32.totalorder %s156, %s157
      %p166 = scmp.eq.s32.totalorder %s20, 0
      %p167 = por %p165, %p166
      %p168 = scmp.ne.s32.totalorder %s156, %s157
      %p169 = scmp.eq.s32.totalorder %s21, 1
      %p170 = por %p168, %p169
      %p172 = scmp.ne.s32.totalorder %s157, %s171
      %p173 = scmp.eq.s32.totalorder %s21, 0
      %p174 = por %p172, %p173
      %s175 = ssub.s32 %s15, %s22
      %p176 = scmp.eq.s32.totalorder %s175, 0
      %s178 = sadd.s32 %s177, 1
      %s179 = scalar_select %p176, %s177, %s178
      %p182 = pneg %p176
      %p183 = scmp.eq.s32.totalorder %s15, 1
      %p184 = por %p182, %p183
      %p185 = scmp.ne.s32.totalorder %s177, %s180
      %p186 = scmp.eq.s32.totalorder %s15, 0
      %p187 = por %p185, %p186
      %p188 = scmp.ne.s32.totalorder %s177, %s180
      %p189 = scmp.eq.s32.totalorder %s20, 1
      %p190 = por %p188, %p189
      %p191 = scmp.ne.s32.totalorder %s180, %s181
      %p192 = scmp.eq.s32.totalorder %s20, 0
      %p193 = por %p191, %p192
      %p194 = scmp.ne.s32.totalorder %s180, %s181
      %p195 = scmp.eq.s32.totalorder %s21, 1
      %p196 = por %p194, %p195
      %p198 = scmp.ne.s32.totalorder %s181, %s197
      %p199 = scmp.eq.s32.totalorder %s21, 0
      %p200 = por %p198, %p199
      %p201 = scmp.le.s32.totalorder 1, %s15
      %p202 = scmp.lt.s32.totalorder %s15, 3
      %p203 = pnand %p201, %p202
      %p204 = pneg %p203
      // Predicated region
      $region9: #{transformer_forward.2} parent=5 // pred_check
        _
      $region10: #{transformer_forward.2} parent=5 // pred_check_branch
        %206 = sbr.rel (%p203) target = $region12
      $region11: #{transformer_forward.2} parent=5 // pred_region
        %s207 = ssub.s32 %s15, 1
        // Predicated region
        $region13: #{transformer_forward.2} parent=11 // pred_check
          %p208 = pneg %p62
        $region14: #{transformer_forward.2} parent=11 // pred_check_branch
          %210 = sbr.rel (%p208) target = $region16
        $region15: #{transformer_forward.2} parent=11 // pred_region
          _
        $region16: #{transformer_forward.2} parent=11 // pred_fallthru
          _
        // Predicated region
        $region17: #{transformer_forward.2} parent=11 // pred_check
          %p211 = pneg %p83
        $region18: #{transformer_forward.2} parent=11 // pred_check_branch
          %213 = sbr.rel (%p211) target = $region20
        $region19: #{transformer_forward.2} parent=11 // pred_region
          _
        $region20: #{transformer_forward.2} parent=11 // pred_fallthru
          _
        // Predicated region
        $region21: #{transformer_forward.2} parent=11 // pred_check
          %p214 = pneg %p104
        $region22: #{transformer_forward.2} parent=11 // pred_check_branch
          %216 = sbr.rel (%p214) target = $region24
        $region23: #{transformer_forward.2} parent=11 // pred_region
          %218 = vsyncadd [#allocation4], 0
          %s219 = sshll.u32 %s3, 4
          %s220 = int_to_ptr.hbm [resolvable:$true] %s219
          %s221 = sshll.u32 [#allocation3], 4
          %s222 = int_to_ptr.vmem [resolvable:$true] %s221
          %227 = dma.hbm_to_vmem [thread:$0]  %s220, 12288, %s222, [#allocation4], 768, 768, 48
        $region24: #{transformer_forward.2} parent=11 // pred_fallthru
          _
        // Predicated region
        $region25: #{transformer_forward.2} parent=11 // pred_check
          %p228 = pneg %p125
        $region26: #{transformer_forward.2} parent=11 // pred_check_branch
          %230 = sbr.rel (%p228) target = $region28
        $region27: #{transformer_forward.2} parent=11 // pred_region
          %232 = vsyncadd [#allocation6], 0
          %s233 = sshll.u32 %s4, 4
          %s234 = int_to_ptr.hbm [resolvable:$true] %s233
          %s235 = sshll.u32 [#allocation5], 4
          %s236 = int_to_ptr.vmem [resolvable:$true] %s235
          %241 = dma.hbm_to_vmem [thread:$0]  %s234, 4096, %s236, [#allocation6], 128, 128, 8
        $region28: #{transformer_forward.2} parent=11 // pred_fallthru
          _
        // Predicated region
        $region29: #{transformer_forward.2} parent=11 // pred_check
          %p242 = pneg %p146
        $region30: #{transformer_forward.2} parent=11 // pred_check_branch
          %244 = sbr.rel (%p242) target = $region32
        $region31: #{transformer_forward.2} parent=11 // pred_region
          _
        $region32: #{transformer_forward.2} parent=11 // pred_fallthru
          _
        // Predicated region
        $region33: #{transformer_forward.2} parent=11 // pred_check
          %p245 = pneg %p167
        $region34: #{transformer_forward.2} parent=11 // pred_check_branch
          %247 = sbr.rel (%p245) target = $region36
        $region35: #{transformer_forward.2} parent=11 // pred_region
          %249 = vsyncadd [#allocation6], 0
          %s250 = sshll.u32 %s6, 4
          %s251 = int_to_ptr.hbm [resolvable:$true] %s250
          %s252 = sshll.u32 [#allocation7], 4
          %s253 = int_to_ptr.vmem [resolvable:$true] %s252
          %258 = dma.hbm_to_vmem [thread:$0]  %s251, 2048, %s253, [#allocation6], 128, 128, 8
        $region36: #{transformer_forward.2} parent=11 // pred_fallthru
          _
      $region12: #{transformer_forward.2} parent=5 // pred_fallthru
        _
      %p259 = scmp.lt.s32.totalorder %s15, 2
      // Predicated region
      $region37: #{transformer_forward.2} parent=5 // pred_check
        %p260 = pneg %p259
      $region38: #{transformer_forward.2} parent=5 // pred_check_branch
        %262 = sbr.rel (%p260) target = $region40
      $region39: #{transformer_forward.2} parent=5 // pred_region
        // Predicated region
        $region41: #{transformer_forward.2} parent=39 // pred_check
          %p263 = pneg %p35
        $region42: #{transformer_forward.2} parent=39 // pred_check_branch
          %265 = sbr.rel (%p263) target = $region44
        $region43: #{transformer_forward.2} parent=39 // pred_region
          %p266 = scmp.lt.s32.totalorder %s15, 1
          %s267 = scalar_select %p266, %s15, 1
          %s268 = smul.addr %s267, 2
          %s269 = smul.addr %s268, 8
          %s270 = scalar_lea.vmem %s0, %s269
        $region44: #{transformer_forward.2} parent=39 // pred_fallthru
          _
      $region40: #{transformer_forward.2} parent=5 // pred_fallthru
        _
      %p271 = scmp.le.s32.totalorder 1, %s15
      %p272 = scmp.lt.s32.totalorder %s15, 3
      %p273 = pnand %p271, %p272
      %p274 = pneg %p273
      // Predicated region
      $region45: #{transformer_forward.2} parent=5 // pred_check
        _
      $region46: #{transformer_forward.2} parent=5 // pred_check_branch
        %276 = sbr.rel (%p273) target = $region48
      $region47: #{transformer_forward.2} parent=5 // pred_region
        %s277 = ssub.s32 %s15, 1
        // Predicated region
        $region49: #{transformer_forward.2} parent=47 // pred_check
          %p278 = pneg %p104
        $region50: #{transformer_forward.2} parent=47 // pred_check_branch
          %280 = sbr.rel (%p278) target = $region52
        $region51: #{transformer_forward.2} parent=47 // pred_region
          %282 = dma.done [#allocation4], 12288
        $region52: #{transformer_forward.2} parent=47 // pred_fallthru
          _
        // Predicated region
        $region53: #{transformer_forward.2} parent=47 // pred_check
          %p283 = pneg %p125
        $region54: #{transformer_forward.2} parent=47 // pred_check_branch
          %285 = sbr.rel (%p283) target = $region56
        $region55: #{transformer_forward.2} parent=47 // pred_region
          %287 = dma.done [#allocation6], 4096
        $region56: #{transformer_forward.2} parent=47 // pred_fallthru
          _
        // Predicated region
        $region57: #{transformer_forward.2} parent=47 // pred_check
          %p288 = pneg %p167
        $region58: #{transformer_forward.2} parent=47 // pred_check_branch
          %290 = sbr.rel (%p288) target = $region60
        $region59: #{transformer_forward.2} parent=47 // pred_region
          %292 = dma.done [#allocation6], 2048
        $region60: #{transformer_forward.2} parent=47 // pred_fallthru
          _
        %p293 = scmp.lt.s32.totalorder %s20, 1
        %s294 = scalar_select %p293, %s20, 1
        %s295 = smul.addr %s294, 2
        %s296 = smul.addr %s295, 8
        %s297 = scalar_lea.vmem %s0, %s296
        %p298 = pneg %p41
        %p299 = pneg %p38
        %p300 = pneg %p62
        %p301 = pneg %p59
        %p302 = pneg %p83
        %p303 = pneg %p80
        %p304 = pneg %p104
        %p305 = pneg %p101
        %p306 = pneg %p125
        %p307 = pneg %p122
        %p308 = pneg %p146
        %p309 = pneg %p143
        %p310 = pneg %p167
        %p311 = pneg %p164
        %p312 = pneg %p193
        %p313 = pneg %p190
        %p314 = scmp.lt.s32.totalorder %s20, 1
        %s315 = scalar_select %p314, %s20, 1
        %s316 = smul.addr %s315, 2
        %s317 = smul.addr %s316, 8
        %s318 = scalar_lea.vmem %s7, %s317
        %p319 = scmp.lt.s32.totalorder %s20, 1
        %s320 = scalar_select %p319, %s20, 1
        %s321 = smul.addr %s320, 2
        %s322 = smul.addr %s321, 8
        %s323 = scalar_lea.vmem %s0, %s322
        %p324 = scmp.lt.s32.totalorder %s20, 1
        %s325 = scalar_select %p324, %s20, 1
        %s326 = smul.addr %s325, 2
        %s327 = smul.addr %s326, 8
        %s328 = scalar_lea.vmem %s7, %s327
        %v329 = vld [vmem:[%s323] sm:$0xff]
        %v330 = vld [vmem:[%s323 + $0x8] sm:$0xff]
        %331 = vadd.xlane.f32.xlu0 %v329
        %v332 = vpop.xlane.xlu0 %331
        %333 = vadd.xlane.f32.xlu0 %v330
        %v334 = vpop.xlane.xlu0 %333
        %v335 = vmul.f32 %v332, 0.03125
        %v336 = vmul.f32 %v334, 0.03125
        %v337 = vmul.f32 %v329, %v329
        %v338 = vmul.f32 %v330, %v330
        %339 = vadd.xlane.f32.xlu0 %v337
        %v340 = vpop.xlane.xlu0 %339
        %341 = vadd.xlane.f32.xlu0 %v338
        %v342 = vpop.xlane.xlu0 %341
        %v343 = vmul.f32 %v340, 0.03125
        %v344 = vmul.f32 %v342, 0.03125
        %v345 = vmul.f32 %v335, %v335
        %v346 = vmul.f32 %v336, %v336
        %v347 = vsub.f32 %v343, %v345
        %v348 = vsub.f32 %v344, %v346
        %v349 = vmax.f32 %v347, 0.0
        %v350 = vmax.f32 %v348, 0.0
        %v351 = vsub.f32 %v329, %v335
        %v352 = vsub.f32 %v330, %v336
        %v353 = vadd.f32 %v349, 1e-05
        %v354 = vadd.f32 %v350, 1e-05
        %v355 = vrsqrt.pop %v353
        %v356 = vmul.f32 %v355, %v353
        %v357 = vmul.f32 %v356, %v355
        %v358 = vmul.f32 0.5, %v357
        %v359 = vsub.f32 1.5, %v358
        %v360 = vmul.f32 %v355, %v359
        %vm361 = vweird.f32 %v353
        %vm362 = vweird.f32 %v355
        %vm363 = vmor %vm361, %vm362
        %v364 = vsel %vm363, %v355, %v360
        %v365 = vrsqrt.pop %v354
        %v366 = vmul.f32 %v365, %v354
        %v367 = vmul.f32 %v366, %v365
        %v368 = vmul.f32 0.5, %v367
        %v369 = vsub.f32 1.5, %v368
        %v370 = vmul.f32 %v365, %v369
        %vm371 = vweird.f32 %v354
        %vm372 = vweird.f32 %v365
        %vm373 = vmor %vm371, %vm372
        %v374 = vsel %vm373, %v365, %v370
        %v375 = vmul.f32 %v351, %v364
        %v376 = vmul.f32 %v352, %v374
        %v377 = vld [vmem:[%s1] sm:$0x1]
        %v379 = vperm.slane %v377, 0
        %v381 = vmul.f32 %v375, %v379
        %v382 = vmul.f32 %v376, %v379
        %v383 = vld [vmem:[%s2] sm:$0x1]
        %v385 = vperm.slane %v383, 0
        %v387 = vadd.f32 %v381, %v385
        %v388 = vadd.f32 %v382, %v385
        %v389 = vld [vmem:[#allocation3] sm:$0xff]
        %v390 = vld [vmem:[#allocation3 + $0x8] sm:$0xff]
        %v391 = vld [vmem:[#allocation3 + $0x10] sm:$0xff]
        %v392 = vld [vmem:[#allocation3 + $0x18] sm:$0xff]
        %v393 = vld [vmem:[#allocation3 + $0x20] sm:$0xff]
        %v394 = vld [vmem:[#allocation3 + $0x28] sm:$0xff]
        %v395 = vld [vmem:[#allocation3 + $0x30] sm:$0xff]
        %v396 = vld [vmem:[#allocation3 + $0x38] sm:$0xff]
        %v397 = vld [vmem:[#allocation3 + $0x40] sm:$0xff]
        %v398 = vld [vmem:[#allocation3 + $0x48] sm:$0xff]
        %v399 = vld [vmem:[#allocation3 + $0x50] sm:$0xff]
        %v400 = vld [vmem:[#allocation3 + $0x58] sm:$0xff]
        %v401 = vld [vmem:[#allocation3 + $0x60] sm:$0xff]
        %v402 = vld [vmem:[#allocation3 + $0x68] sm:$0xff]
        %v403 = vld [vmem:[#allocation3 + $0x70] sm:$0xff]
        %v404 = vld [vmem:[#allocation3 + $0x78] sm:$0xff]
        %v405 = vld [vmem:[#allocation3 + $0x80] sm:$0xff]
        %v406 = vld [vmem:[#allocation3 + $0x88] sm:$0xff]
        %v407 = vld [vmem:[#allocation3 + $0x90] sm:$0xff]
        %v408 = vld [vmem:[#allocation3 + $0x98] sm:$0xff]
        %v409 = vld [vmem:[#allocation3 + $0xa0] sm:$0xff]
        %v410 = vld [vmem:[#allocation3 + $0xa8] sm:$0xff]
        %v411 = vld [vmem:[#allocation3 + $0xb0] sm:$0xff]
        %v412 = vld [vmem:[#allocation3 + $0xb8] sm:$0xff]
        %v413 = vld [vmem:[#allocation3 + $0xc0] sm:$0xff]
        %v414 = vld [vmem:[#allocation3 + $0xc8] sm:$0xff]
        %v415 = vld [vmem:[#allocation3 + $0xd0] sm:$0xff]
        %v416 = vld [vmem:[#allocation3 + $0xd8] sm:$0xff]
        %v417 = vld [vmem:[#allocation3 + $0xe0] sm:$0xff]
        %v418 = vld [vmem:[#allocation3 + $0xe8] sm:$0xff]
        %v419 = vld [vmem:[#allocation3 + $0xf0] sm:$0xff]
        %v420 = vld [vmem:[#allocation3 + $0xf8] sm:$0xff]
        %v421 = vld [vmem:[#allocation3 + $0x100] sm:$0xff]
        %v422 = vld [vmem:[#allocation3 + $0x108] sm:$0xff]
        %v423 = vld [vmem:[#allocation3 + $0x110] sm:$0xff]
        %v424 = vld [vmem:[#allocation3 + $0x118] sm:$0xff]
        %v425 = vld [vmem:[#allocation3 + $0x120] sm:$0xff]
        %v426 = vld [vmem:[#allocation3 + $0x128] sm:$0xff]
        %v427 = vld [vmem:[#allocation3 + $0x130] sm:$0xff]
        %v428 = vld [vmem:[#allocation3 + $0x138] sm:$0xff]
        %v429 = vld [vmem:[#allocation3 + $0x140] sm:$0xff]
        %v430 = vld [vmem:[#allocation3 + $0x148] sm:$0xff]
        %v431 = vld [vmem:[#allocation3 + $0x150] sm:$0xff]
        %v432 = vld [vmem:[#allocation3 + $0x158] sm:$0xff]
        %v433 = vld [vmem:[#allocation3 + $0x160] sm:$0xff]
        %v434 = vld [vmem:[#allocation3 + $0x168] sm:$0xff]
        %v435 = vld [vmem:[#allocation3 + $0x170] sm:$0xff]
        %v436 = vld [vmem:[#allocation3 + $0x178] sm:$0xff]
        %v437 = vld [vmem:[#allocation3 + $0x180] sm:$0xff]
        %v438 = vld [vmem:[#allocation3 + $0x188] sm:$0xff]
        %v439 = vld [vmem:[#allocation3 + $0x190] sm:$0xff]
        %v440 = vld [vmem:[#allocation3 + $0x198] sm:$0xff]
        %v441 = vld [vmem:[#allocation3 + $0x1a0] sm:$0xff]
        %v442 = vld [vmem:[#allocation3 + $0x1a8] sm:$0xff]
        %v443 = vld [vmem:[#allocation3 + $0x1b0] sm:$0xff]
        %v444 = vld [vmem:[#allocation3 + $0x1b8] sm:$0xff]
        %v445 = vld [vmem:[#allocation3 + $0x1c0] sm:$0xff]
        %v446 = vld [vmem:[#allocation3 + $0x1c8] sm:$0xff]
        %v447 = vld [vmem:[#allocation3 + $0x1d0] sm:$0xff]
        %v448 = vld [vmem:[#allocation3 + $0x1d8] sm:$0xff]
        %v449 = vld [vmem:[#allocation3 + $0x1e0] sm:$0xff]
        %v450 = vld [vmem:[#allocation3 + $0x1e8] sm:$0xff]
        %v451 = vld [vmem:[#allocation3 + $0x1f0] sm:$0xff]
        %v452 = vld [vmem:[#allocation3 + $0x1f8] sm:$0xff]
        %v453 = vld [vmem:[#allocation3 + $0x200] sm:$0xff]
        %v454 = vld [vmem:[#allocation3 + $0x208] sm:$0xff]
        %v455 = vld [vmem:[#allocation3 + $0x210] sm:$0xff]
        %v456 = vld [vmem:[#allocation3 + $0x218] sm:$0xff]
        %v457 = vld [vmem:[#allocation3 + $0x220] sm:$0xff]
        %v458 = vld [vmem:[#allocation3 + $0x228] sm:$0xff]
        %v459 = vld [vmem:[#allocation3 + $0x230] sm:$0xff]
        %v460 = vld [vmem:[#allocation3 + $0x238] sm:$0xff]
        %v461 = vld [vmem:[#allocation3 + $0x240] sm:$0xff]
        %v462 = vld [vmem:[#allocation3 + $0x248] sm:$0xff]
        %v463 = vld [vmem:[#allocation3 + $0x250] sm:$0xff]
        %v464 = vld [vmem:[#allocation3 + $0x258] sm:$0xff]
        %v465 = vld [vmem:[#allocation3 + $0x260] sm:$0xff]
        %v466 = vld [vmem:[#allocation3 + $0x268] sm:$0xff]
        %v467 = vld [vmem:[#allocation3 + $0x270] sm:$0xff]
        %v468 = vld [vmem:[#allocation3 + $0x278] sm:$0xff]
        %v469 = vld [vmem:[#allocation3 + $0x280] sm:$0xff]
        %v470 = vld [vmem:[#allocation3 + $0x288] sm:$0xff]
        %v471 = vld [vmem:[#allocation3 + $0x290] sm:$0xff]
        %v472 = vld [vmem:[#allocation3 + $0x298] sm:$0xff]
        %v473 = vld [vmem:[#allocation3 + $0x2a0] sm:$0xff]
        %v474 = vld [vmem:[#allocation3 + $0x2a8] sm:$0xff]
        %v475 = vld [vmem:[#allocation3 + $0x2b0] sm:$0xff]
        %v476 = vld [vmem:[#allocation3 + $0x2b8] sm:$0xff]
        %v477 = vld [vmem:[#allocation3 + $0x2c0] sm:$0xff]
        %v478 = vld [vmem:[#allocation3 + $0x2c8] sm:$0xff]
        %v479 = vld [vmem:[#allocation3 + $0x2d0] sm:$0xff]
        %v480 = vld [vmem:[#allocation3 + $0x2d8] sm:$0xff]
        %v481 = vld [vmem:[#allocation3 + $0x2e0] sm:$0xff]
        %v482 = vld [vmem:[#allocation3 + $0x2e8] sm:$0xff]
        %v483 = vld [vmem:[#allocation3 + $0x2f0] sm:$0xff]
        %v484 = vld [vmem:[#allocation3 + $0x2f8] sm:$0xff]
        %485 = vmatpush.msra.mxu0 %v479
        %486 = vmatpush.msra.mxu0 %v473
        %487 = vmatpush.msra.mxu0 %v467
        %488 = vmatpush.msra.mxu0 %v461
        %489 = vmatpush.msra.mxu0 %v455
        %490 = vmatpush.msra.mxu0 %v449
        %491 = vmatpush.msra.mxu0 %v443
        %492 = vmatpush.msra.mxu0 %v437
        %493 = vmatpush.msra.mxu0 %v431
        %494 = vmatpush.msra.mxu0 %v425
        %495 = vmatpush.msra.mxu0 %v419
        %496 = vmatpush.msra.mxu0 %v413
        %497 = vmatpush.msra.mxu0 %v407
        %498 = vmatpush.msra.mxu0 %v401
        %499 = vmatpush.msra.mxu0 %v395
        %500 = vmatpush.msra.mxu0 %v389
        %501 = vmatmul.f32.gmra.mxu0 %v387
        %v502 = vpop.f32.mrf.mxu0
        %v503 = vadd.f32 0.0, %v502
        %504 = vmatmul.f32.gmra.mxu0 %v388
        %v505 = vpop.f32.mrf.mxu0
        %v506 = vadd.f32 0.0, %v505
        %507 = vdwg.mxu0
        %508 = vmatpush.msra.mxu0 %v480
        %509 = vmatpush.msra.mxu0 %v474
        %510 = vmatpush.msra.mxu0 %v468
        %511 = vmatpush.msra.mxu0 %v462
        %512 = vmatpush.msra.mxu0 %v456
        %513 = vmatpush.msra.mxu0 %v450
        %514 = vmatpush.msra.mxu0 %v444
        %515 = vmatpush.msra.mxu0 %v438
        %516 = vmatpush.msra.mxu0 %v432
        %517 = vmatpush.msra.mxu0 %v426
        %518 = vmatpush.msra.mxu0 %v420
        %519 = vmatpush.msra.mxu0 %v414
        %520 = vmatpush.msra.mxu0 %v408
        %521 = vmatpush.msra.mxu0 %v402
        %522 = vmatpush.msra.mxu0 %v396
        %523 = vmatpush.msra.mxu0 %v390
        %524 = vmatmul.f32.gmra.mxu0 %v387
        %v525 = vpop.f32.mrf.mxu0
        %v526 = vadd.f32 0.0, %v525
        %527 = vmatmul.f32.gmra.mxu0 %v388
        %v528 = vpop.f32.mrf.mxu0
        %v529 = vadd.f32 0.0, %v528
        %530 = vdwg.mxu0
        %531 = vmatpush.msra.mxu0 %v481
        %532 = vmatpush.msra.mxu0 %v475
        %533 = vmatpush.msra.mxu0 %v469
        %534 = vmatpush.msra.mxu0 %v463
        %535 = vmatpush.msra.mxu0 %v457
        %536 = vmatpush.msra.mxu0 %v451
        %537 = vmatpush.msra.mxu0 %v445
        %538 = vmatpush.msra.mxu0 %v439
        %539 = vmatpush.msra.mxu0 %v433
        %540 = vmatpush.msra.mxu0 %v427
        %541 = vmatpush.msra.mxu0 %v421
        %542 = vmatpush.msra.mxu0 %v415
        %543 = vmatpush.msra.mxu0 %v409
        %544 = vmatpush.msra.mxu0 %v403
        %545 = vmatpush.msra.mxu0 %v397
        %546 = vmatpush.msra.mxu0 %v391
        %547 = vmatmul.f32.gmra.mxu0 %v387
        %v548 = vpop.f32.mrf.mxu0
        %v549 = vadd.f32 0.0, %v548
        %550 = vmatmul.f32.gmra.mxu0 %v388
        %v551 = vpop.f32.mrf.mxu0
        %v552 = vadd.f32 0.0, %v551
        %553 = vdwg.mxu0
        %554 = vmatpush.msra.mxu0 %v482
        %555 = vmatpush.msra.mxu0 %v476
        %556 = vmatpush.msra.mxu0 %v470
        %557 = vmatpush.msra.mxu0 %v464
        %558 = vmatpush.msra.mxu0 %v458
        %559 = vmatpush.msra.mxu0 %v452
        %560 = vmatpush.msra.mxu0 %v446
        %561 = vmatpush.msra.mxu0 %v440
        %562 = vmatpush.msra.mxu0 %v434
        %563 = vmatpush.msra.mxu0 %v428
        %564 = vmatpush.msra.mxu0 %v422
        %565 = vmatpush.msra.mxu0 %v416
        %566 = vmatpush.msra.mxu0 %v410
        %567 = vmatpush.msra.mxu0 %v404
        %568 = vmatpush.msra.mxu0 %v398
        %569 = vmatpush.msra.mxu0 %v392
        %570 = vmatmul.f32.gmra.mxu0 %v387
        %v571 = vpop.f32.mrf.mxu0
        %v572 = vadd.f32 0.0, %v571
        %573 = vmatmul.f32.gmra.mxu0 %v388
        %v574 = vpop.f32.mrf.mxu0
        %v575 = vadd.f32 0.0, %v574
        %576 = vdwg.mxu0
        %577 = vmatpush.msra.mxu0 %v483
        %578 = vmatpush.msra.mxu0 %v477
        %579 = vmatpush.msra.mxu0 %v471
        %580 = vmatpush.msra.mxu0 %v465
        %581 = vmatpush.msra.mxu0 %v459
        %582 = vmatpush.msra.mxu0 %v453
        %583 = vmatpush.msra.mxu0 %v447
        %584 = vmatpush.msra.mxu0 %v441
        %585 = vmatpush.msra.mxu0 %v435
        %586 = vmatpush.msra.mxu0 %v429
        %587 = vmatpush.msra.mxu0 %v423
        %588 = vmatpush.msra.mxu0 %v417
        %589 = vmatpush.msra.mxu0 %v411
        %590 = vmatpush.msra.mxu0 %v405
        %591 = vmatpush.msra.mxu0 %v399
        %592 = vmatpush.msra.mxu0 %v393
        %593 = vmatmul.f32.gmra.mxu0 %v387
        %v594 = vpop.f32.mrf.mxu0
        %v595 = vadd.f32 0.0, %v594
        %596 = vmatmul.f32.gmra.mxu0 %v388
        %v597 = vpop.f32.mrf.mxu0
        %v598 = vadd.f32 0.0, %v597
        %599 = vdwg.mxu0
        %600 = vmatpush.msra.mxu0 %v484
        %601 = vmatpush.msra.mxu0 %v478
        %602 = vmatpush.msra.mxu0 %v472
        %603 = vmatpush.msra.mxu0 %v466
        %604 = vmatpush.msra.mxu0 %v460
        %605 = vmatpush.msra.mxu0 %v454
        %606 = vmatpush.msra.mxu0 %v448
        %607 = vmatpush.msra.mxu0 %v442
        %608 = vmatpush.msra.mxu0 %v436
        %609 = vmatpush.msra.mxu0 %v430
        %610 = vmatpush.msra.mxu0 %v424
        %611 = vmatpush.msra.mxu0 %v418
        %612 = vmatpush.msra.mxu0 %v412
        %613 = vmatpush.msra.mxu0 %v406
        %614 = vmatpush.msra.mxu0 %v400
        %615 = vmatpush.msra.mxu0 %v394
        %616 = vmatmul.f32.gmra.mxu0 %v387
        %v617 = vpop.f32.mrf.mxu0
        %v618 = vadd.f32 0.0, %v617
        %619 = vmatmul.f32.gmra.mxu0 %v388
        %v620 = vpop.f32.mrf.mxu0
        %v621 = vadd.f32 0.0, %v620
        %622 = vdwg.mxu0
        %vm623 = vcmask 261120
        %v625 = vsel %vm623, %v503, 0
        %v628 = vsel %vm623, %v506, 0
        %v631 = vsel %vm623, %v549, 0
        %v634 = vsel %vm623, %v552, 0
        %636 = vmatpush.xpose.msra.mxu0 0.0
        %637 = vmatpush.xpose.msra.mxu0 0.0
        %638 = vmatpush.xpose.msra.mxu0 0.0
        %639 = vmatpush.xpose.msra.mxu0 0.0
        %640 = vmatpush.xpose.msra.mxu0 0.0
        %641 = vmatpush.xpose.msra.mxu0 0.0
        %642 = vmatpush.xpose.msra.mxu0 0.0
        %643 = vmatpush.xpose.msra.mxu0 0.0
        %644 = vmatpush.xpose.msra.mxu0 0.0
        %645 = vmatpush.xpose.msra.mxu0 0.0
        %646 = vmatpush.xpose.msra.mxu0 0.0
        %647 = vmatpush.xpose.msra.mxu0 0.0
        %648 = vmatpush.xpose.msra.mxu0 0.0
        %649 = vmatpush.xpose.msra.mxu0 0.0
        %650 = vmatpush.xpose.msra.mxu0 %v634
        %651 = vmatpush.xpose.msra.mxu0 %v631
        %652 = vmatmul.f32.gmra.mxu0 %v625
        %v653 = vpop.f32.mrf.mxu0
        %v654 = vadd.f32 0.0, %v653
        %655 = vmatmul.f32.gmra.mxu0 %v628
        %v656 = vpop.f32.mrf.mxu0
        %v657 = vadd.f32 0.0, %v656
        %658 = vdwg.mxu0
        %v659 = vmul.f32 %v654, 0.17677669
        %v660 = vmul.f32 %v657, 0.17677669
        %v661 = vld [vmem:[#allocation7] sm:$0xff]
        %v662 = vld [vmem:[#allocation7 + $0x8] sm:$0xff]
        %v663 = vadd.f32 %v659, %v661
        %v664 = vadd.f32 %v660, %v662
        %vm665 = vcmask 130048
        %v666 = vsel %vm665, %v663, -inf
        %667 = vmax.xlane.f32.xlu0 %v666
        %v668 = vpop.xlane.xlu0 %667
        %v669 = vsel %vm665, %v664, -inf
        %670 = vmax.xlane.f32.xlu0 %v669
        %v671 = vpop.xlane.xlu0 %670
        %v672 = vsub.f32 %v663, %v668
        %v673 = vsub.f32 %v664, %v671
        %v674 = vmul.f32 %v672, 1.442695
        %v675 = vpow.pop %v674
        %v676 = vmul.f32 %v673, 1.442695
        %v677 = vpow.pop %v676
        %v678 = vsel %vm665, %v675, 0.0
        %679 = vadd.xlane.f32.xlu0 %v678
        %v680 = vpop.xlane.xlu0 %679
        %v681 = vsel %vm665, %v677, 0.0
        %682 = vadd.xlane.f32.xlu0 %v681
        %v683 = vpop.xlane.xlu0 %682
        %v684 = vrcp.pop %v680
        %v685 = vrcp.pop %v683
        %v686 = vmul.f32 %v680, %v684
        %v687 = vmul.f32 %v683, %v685
        %v688 = vsub.f32 2.0, %v686
        %v689 = vsub.f32 2.0, %v687
        %v690 = vmul.f32 %v684, %v688
        %v691 = vmul.f32 %v685, %v689
        %v692 = vmul.f32 %v675, %v690
        %v693 = vmul.f32 %v677, %v691
        %v695 = vsel %vm665, %v692, 0
        %v698 = vsel %vm665, %v693, 0
        %700 = vmatpush.msra.mxu0 0.0
        %701 = vmatpush.msra.mxu0 0.0
        %702 = vmatpush.msra.mxu0 0.0
        %703 = vmatpush.msra.mxu0 0.0
        %704 = vmatpush.msra.mxu0 0.0
        %705 = vmatpush.msra.mxu0 0.0
        %706 = vmatpush.msra.mxu0 0.0
        %707 = vmatpush.msra.mxu0 0.0
        %708 = vmatpush.msra.mxu0 0.0
        %709 = vmatpush.msra.mxu0 0.0
        %710 = vmatpush.msra.mxu0 0.0
        %711 = vmatpush.msra.mxu0 0.0
        %712 = vmatpush.msra.mxu0 0.0
        %713 = vmatpush.msra.mxu0 0.0
        %714 = vmatpush.msra.mxu0 %v598
        %715 = vmatpush.msra.mxu0 %v595
        %716 = vmatmul.f32.gmra.mxu0 %v695
        %v717 = vpop.f32.mrf.mxu0
        %v718 = vadd.f32 0.0, %v717
        %719 = vmatmul.f32.gmra.mxu0 %v698
        %v720 = vpop.f32.mrf.mxu0
        %v721 = vadd.f32 0.0, %v720
        %722 = vdwg.mxu0
        %723 = vst.msk [vmem:[#allocation2] sm:$0xff] %vm623, %v718
        %724 = vst.msk [vmem:[#allocation2 + $0x10] sm:$0xff] %vm623, %v721
        %725 = vrot.lane.b32.xlu0 %v503, 96
        %v726 = vpop.permute.xlu0 %725
        %727 = vrot.lane.b32.xlu0 %v506, 96
        %v728 = vpop.permute.xlu0 %727
        %729 = vrot.lane.b32.xlu0 %v549, 96
        %v730 = vpop.permute.xlu0 %729
        %731 = vrot.lane.b32.xlu0 %v552, 96
        %v732 = vpop.permute.xlu0 %731
        %v733 = vsel %vm623, %v726, 0
        %v735 = vsel %vm623, %v728, 0
        %v737 = vsel %vm623, %v730, 0
        %v739 = vsel %vm623, %v732, 0
        %741 = vmatpush.xpose.msra.mxu0 0.0
        %742 = vmatpush.xpose.msra.mxu0 0.0
        %743 = vmatpush.xpose.msra.mxu0 0.0
        %744 = vmatpush.xpose.msra.mxu0 0.0
        %745 = vmatpush.xpose.msra.mxu0 0.0
        %746 = vmatpush.xpose.msra.mxu0 0.0
        %747 = vmatpush.xpose.msra.mxu0 0.0
        %748 = vmatpush.xpose.msra.mxu0 0.0
        %749 = vmatpush.xpose.msra.mxu0 0.0
        %750 = vmatpush.xpose.msra.mxu0 0.0
        %751 = vmatpush.xpose.msra.mxu0 0.0
        %752 = vmatpush.xpose.msra.mxu0 0.0
        %753 = vmatpush.xpose.msra.mxu0 0.0
        %754 = vmatpush.xpose.msra.mxu0 0.0
        %755 = vmatpush.xpose.msra.mxu0 %v739
        %756 = vmatpush.xpose.msra.mxu0 %v737
        %757 = vmatmul.f32.gmra.mxu0 %v733
        %v758 = vpop.f32.mrf.mxu0
        %v759 = vadd.f32 0.0, %v758
        %760 = vmatmul.f32.gmra.mxu0 %v735
        %v761 = vpop.f32.mrf.mxu0
        %v762 = vadd.f32 0.0, %v761
        %763 = vdwg.mxu0
        %v764 = vmul.f32 %v759, 0.17677669
        %v765 = vmul.f32 %v762, 0.17677669
        %s766 = scalar_lea.vmem [#allocation7], 16
        %v767 = vld [vmem:[%s766] sm:$0xff]
        %v768 = vld [vmem:[%s766 + $0x8] sm:$0xff]
        %v769 = vadd.f32 %v764, %v767
        %v770 = vadd.f32 %v765, %v768
        %v771 = vsel %vm665, %v769, -inf
        %772 = vmax.xlane.f32.xlu0 %v771
        %v773 = vpop.xlane.xlu0 %772
        %v774 = vsel %vm665, %v770, -inf
        %775 = vmax.xlane.f32.xlu0 %v774
        %v776 = vpop.xlane.xlu0 %775
        %v777 = vsub.f32 %v769, %v773
        %v778 = vsub.f32 %v770, %v776
        %v779 = vmul.f32 %v777, 1.442695
        %v780 = vpow.pop %v779
        %v781 = vmul.f32 %v778, 1.442695
        %v782 = vpow.pop %v781
        %v783 = vsel %vm665, %v780, 0.0
        %784 = vadd.xlane.f32.xlu0 %v783
        %v785 = vpop.xlane.xlu0 %784
        %v786 = vsel %vm665, %v782, 0.0
        %787 = vadd.xlane.f32.xlu0 %v786
        %v788 = vpop.xlane.xlu0 %787
        %v789 = vrcp.pop %v785
        %v790 = vrcp.pop %v788
        %v791 = vmul.f32 %v785, %v789
        %v792 = vmul.f32 %v788, %v790
        %v793 = vsub.f32 2.0, %v791
        %v794 = vsub.f32 2.0, %v792
        %v795 = vmul.f32 %v789, %v793
        %v796 = vmul.f32 %v790, %v794
        %v797 = vmul.f32 %v780, %v795
        %v798 = vmul.f32 %v782, %v796
        %801 = vrot.lane.b32.xlu0 %v595, 96
        %v802 = vpop.permute.xlu0 %801
        %803 = vrot.lane.b32.xlu0 %v598, 96
        %v804 = vpop.permute.xlu0 %803
        %v808 = vsel %vm665, %v797, 0
        %v811 = vsel %vm665, %v798, 0
        %813 = vmatpush.msra.mxu0 0.0
        %814 = vmatpush.msra.mxu0 0.0
        %815 = vmatpush.msra.mxu0 0.0
        %816 = vmatpush.msra.mxu0 0.0
        %817 = vmatpush.msra.mxu0 0.0
        %818 = vmatpush.msra.mxu0 0.0
        %819 = vmatpush.msra.mxu0 0.0
        %820 = vmatpush.msra.mxu0 0.0
        %821 = vmatpush.msra.mxu0 0.0
        %822 = vmatpush.msra.mxu0 0.0
        %823 = vmatpush.msra.mxu0 0.0
        %824 = vmatpush.msra.mxu0 0.0
        %825 = vmatpush.msra.mxu0 0.0
        %826 = vmatpush.msra.mxu0 0.0
        %827 = vmatpush.msra.mxu0 %v804
        %828 = vmatpush.msra.mxu0 %v802
        %829 = vmatmul.f32.gmra.mxu0 %v808
        %v830 = vpop.f32.mrf.mxu0
        %v831 = vadd.f32 0.0, %v830
        %832 = vmatmul.f32.gmra.mxu0 %v811
        %v833 = vpop.f32.mrf.mxu0
        %v834 = vadd.f32 0.0, %v833
        %835 = vdwg.mxu0
        %838 = vrot.lane.b32.xlu0 %v831, 32
        %v839 = vpop.permute.xlu0 %838
        %840 = vrot.lane.b32.xlu0 %v834, 32
        %v841 = vpop.permute.xlu0 %840
        %vm844 = vcmask 523520
        %845 = vst.msk [vmem:[#allocation2] sm:$0xff] %vm844, %v839
        %846 = vst.msk [vmem:[#allocation2 + $0x10] sm:$0xff] %vm844, %v841
        %847 = vrot.lane.b32.xlu0 %v503, 64
        %v848 = vpop.permute.xlu0 %847
        %849 = vrot.lane.b32.xlu0 %v506, 64
        %v850 = vpop.permute.xlu0 %849
        %851 = vrot.lane.b32.xlu0 %v549, 64
        %v852 = vpop.permute.xlu0 %851
        %853 = vrot.lane.b32.xlu0 %v552, 64
        %v854 = vpop.permute.xlu0 %853
        %v855 = vsel %vm623, %v848, 0
        %v857 = vsel %vm623, %v850, 0
        %v859 = vsel %vm623, %v852, 0
        %v861 = vsel %vm623, %v854, 0
        %863 = vmatpush.xpose.msra.mxu0 0.0
        %864 = vmatpush.xpose.msra.mxu0 0.0
        %865 = vmatpush.xpose.msra.mxu0 0.0
        %866 = vmatpush.xpose.msra.mxu0 0.0
        %867 = vmatpush.xpose.msra.mxu0 0.0
        %868 = vmatpush.xpose.msra.mxu0 0.0
        %869 = vmatpush.xpose.msra.mxu0 0.0
        %870 = vmatpush.xpose.msra.mxu0 0.0
        %871 = vmatpush.xpose.msra.mxu0 0.0
        %872 = vmatpush.xpose.msra.mxu0 0.0
        %873 = vmatpush.xpose.msra.mxu0 0.0
        %874 = vmatpush.xpose.msra.mxu0 0.0
        %875 = vmatpush.xpose.msra.mxu0 0.0
        %876 = vmatpush.xpose.msra.mxu0 0.0
        %877 = vmatpush.xpose.msra.mxu0 %v861
        %878 = vmatpush.xpose.msra.mxu0 %v859
        %879 = vmatmul.f32.gmra.mxu0 %v855
        %v880 = vpop.f32.mrf.mxu0
        %v881 = vadd.f32 0.0, %v880
        %882 = vmatmul.f32.gmra.mxu0 %v857
        %v883 = vpop.f32.mrf.mxu0
        %v884 = vadd.f32 0.0, %v883
        %885 = vdwg.mxu0
        %v886 = vmul.f32 %v881, 0.17677669
        %v887 = vmul.f32 %v884, 0.17677669
        %s888 = scalar_lea.vmem [#allocation7], 32
        %v889 = vld [vmem:[%s888] sm:$0xff]
        %v890 = vld [vmem:[%s888 + $0x8] sm:$0xff]
        %v891 = vadd.f32 %v886, %v889
        %v892 = vadd.f32 %v887, %v890
        %v893 = vsel %vm665, %v891, -inf
        %894 = vmax.xlane.f32.xlu0 %v893
        %v895 = vpop.xlane.xlu0 %894
        %v896 = vsel %vm665, %v892, -inf
        %897 = vmax.xlane.f32.xlu0 %v896
        %v898 = vpop.xlane.xlu0 %897
        %v899 = vsub.f32 %v891, %v895
        %v900 = vsub.f32 %v892, %v898
        %v901 = vmul.f32 %v899, 1.442695
        %v902 = vpow.pop %v901
        %v903 = vmul.f32 %v900, 1.442695
        %v904 = vpow.pop %v903
        %v905 = vsel %vm665, %v902, 0.0
        %906 = vadd.xlane.f32.xlu0 %v905
        %v907 = vpop.xlane.xlu0 %906
        %v908 = vsel %vm665, %v904, 0.0
        %909 = vadd.xlane.f32.xlu0 %v908
        %v910 = vpop.xlane.xlu0 %909
        %v911 = vrcp.pop %v907
        %v912 = vrcp.pop %v910
        %v913 = vmul.f32 %v907, %v911
        %v914 = vmul.f32 %v910, %v912
        %v915 = vsub.f32 2.0, %v913
        %v916 = vsub.f32 2.0, %v914
        %v917 = vmul.f32 %v911, %v915
        %v918 = vmul.f32 %v912, %v916
        %v919 = vmul.f32 %v902, %v917
        %v920 = vmul.f32 %v904, %v918
        %921 = vrot.lane.b32.xlu0 %v595, 64
        %v922 = vpop.permute.xlu0 %921
        %923 = vrot.lane.b32.xlu0 %v598, 64
        %v924 = vpop.permute.xlu0 %923
        %v928 = vsel %vm665, %v919, 0
        %v931 = vsel %vm665, %v920, 0
        %933 = vmatpush.msra.mxu0 0.0
        %934 = vmatpush.msra.mxu0 0.0
        %935 = vmatpush.msra.mxu0 0.0
        %936 = vmatpush.msra.mxu0 0.0
        %937 = vmatpush.msra.mxu0 0.0
        %938 = vmatpush.msra.mxu0 0.0
        %939 = vmatpush.msra.mxu0 0.0
        %940 = vmatpush.msra.mxu0 0.0
        %941 = vmatpush.msra.mxu0 0.0
        %942 = vmatpush.msra.mxu0 0.0
        %943 = vmatpush.msra.mxu0 0.0
        %944 = vmatpush.msra.mxu0 0.0
        %945 = vmatpush.msra.mxu0 0.0
        %946 = vmatpush.msra.mxu0 0.0
        %947 = vmatpush.msra.mxu0 %v924
        %948 = vmatpush.msra.mxu0 %v922
        %949 = vmatmul.f32.gmra.mxu0 %v928
        %v950 = vpop.f32.mrf.mxu0
        %v951 = vadd.f32 0.0, %v950
        %952 = vmatmul.f32.gmra.mxu0 %v931
        %v953 = vpop.f32.mrf.mxu0
        %v954 = vadd.f32 0.0, %v953
        %955 = vdwg.mxu0
        %958 = vrot.lane.b32.xlu0 %v951, 64
        %v959 = vpop.permute.xlu0 %958
        %960 = vrot.lane.b32.xlu0 %v954, 64
        %v961 = vpop.permute.xlu0 %960
        %vm964 = vcmask 785920
        %965 = vst.msk [vmem:[#allocation2] sm:$0xff] %vm964, %v959
        %966 = vst.msk [vmem:[#allocation2 + $0x10] sm:$0xff] %vm964, %v961
        %967 = vrot.lane.b32.xlu0 %v503, 32
        %v968 = vpop.permute.xlu0 %967
        %969 = vrot.lane.b32.xlu0 %v506, 32
        %v970 = vpop.permute.xlu0 %969
        %971 = vrot.lane.b32.xlu0 %v549, 32
        %v972 = vpop.permute.xlu0 %971
        %973 = vrot.lane.b32.xlu0 %v552, 32
        %v974 = vpop.permute.xlu0 %973
        %v975 = vsel %vm623, %v968, 0
        %v977 = vsel %vm623, %v970, 0
        %v979 = vsel %vm623, %v972, 0
        %v981 = vsel %vm623, %v974, 0
        %983 = vmatpush.xpose.msra.mxu0 0.0
        %984 = vmatpush.xpose.msra.mxu0 0.0
        %985 = vmatpush.xpose.msra.mxu0 0.0
        %986 = vmatpush.xpose.msra.mxu0 0.0
        %987 = vmatpush.xpose.msra.mxu0 0.0
        %988 = vmatpush.xpose.msra.mxu0 0.0
        %989 = vmatpush.xpose.msra.mxu0 0.0
        %990 = vmatpush.xpose.msra.mxu0 0.0
        %991 = vmatpush.xpose.msra.mxu0 0.0
        %992 = vmatpush.xpose.msra.mxu0 0.0
        %993 = vmatpush.xpose.msra.mxu0 0.0
        %994 = vmatpush.xpose.msra.mxu0 0.0
        %995 = vmatpush.xpose.msra.mxu0 0.0
        %996 = vmatpush.xpose.msra.mxu0 0.0
        %997 = vmatpush.xpose.msra.mxu0 %v981
        %998 = vmatpush.xpose.msra.mxu0 %v979
        %999 = vmatmul.f32.gmra.mxu0 %v975
        %v1000 = vpop.f32.mrf.mxu0
        %v1001 = vadd.f32 0.0, %v1000
        %1002 = vmatmul.f32.gmra.mxu0 %v977
        %v1003 = vpop.f32.mrf.mxu0
        %v1004 = vadd.f32 0.0, %v1003
        %1005 = vdwg.mxu0
        %v1006 = vmul.f32 %v1001, 0.17677669
        %v1007 = vmul.f32 %v1004, 0.17677669
        %s1008 = scalar_lea.vmem [#allocation7], 48
        %v1009 = vld [vmem:[%s1008] sm:$0xff]
        %v1010 = vld [vmem:[%s1008 + $0x8] sm:$0xff]
        %v1011 = vadd.f32 %v1006, %v1009
        %v1012 = vadd.f32 %v1007, %v1010
        %v1013 = vsel %vm665, %v1011, -inf
        %1014 = vmax.xlane.f32.xlu0 %v1013
        %v1015 = vpop.xlane.xlu0 %1014
        %v1016 = vsel %vm665, %v1012, -inf
        %1017 = vmax.xlane.f32.xlu0 %v1016
        %v1018 = vpop.xlane.xlu0 %1017
        %v1019 = vsub.f32 %v1011, %v1015
        %v1020 = vsub.f32 %v1012, %v1018
        %v1021 = vmul.f32 %v1019, 1.442695
        %v1022 = vpow.pop %v1021
        %v1023 = vmul.f32 %v1020, 1.442695
        %v1024 = vpow.pop %v1023
        %v1025 = vsel %vm665, %v1022, 0.0
        %1026 = vadd.xlane.f32.xlu0 %v1025
        %v1027 = vpop.xlane.xlu0 %1026
        %v1028 = vsel %vm665, %v1024, 0.0
        %1029 = vadd.xlane.f32.xlu0 %v1028
        %v1030 = vpop.xlane.xlu0 %1029
        %v1031 = vrcp.pop %v1027
        %v1032 = vrcp.pop %v1030
        %v1033 = vmul.f32 %v1027, %v1031
        %v1034 = vmul.f32 %v1030, %v1032
        %v1035 = vsub.f32 2.0, %v1033
        %v1036 = vsub.f32 2.0, %v1034
        %v1037 = vmul.f32 %v1031, %v1035
        %v1038 = vmul.f32 %v1032, %v1036
        %v1039 = vmul.f32 %v1022, %v1037
        %v1040 = vmul.f32 %v1024, %v1038
        %1041 = vrot.lane.b32.xlu0 %v595, 32
        %v1042 = vpop.permute.xlu0 %1041
        %1043 = vrot.lane.b32.xlu0 %v598, 32
        %v1044 = vpop.permute.xlu0 %1043
        %v1048 = vsel %vm665, %v1039, 0
        %v1051 = vsel %vm665, %v1040, 0
        %1053 = vmatpush.msra.mxu0 0.0
        %1054 = vmatpush.msra.mxu0 0.0
        %1055 = vmatpush.msra.mxu0 0.0
        %1056 = vmatpush.msra.mxu0 0.0
        %1057 = vmatpush.msra.mxu0 0.0
        %1058 = vmatpush.msra.mxu0 0.0
        %1059 = vmatpush.msra.mxu0 0.0
        %1060 = vmatpush.msra.mxu0 0.0
        %1061 = vmatpush.msra.mxu0 0.0
        %1062 = vmatpush.msra.mxu0 0.0
        %1063 = vmatpush.msra.mxu0 0.0
        %1064 = vmatpush.msra.mxu0 0.0
        %1065 = vmatpush.msra.mxu0 0.0
        %1066 = vmatpush.msra.mxu0 0.0
        %1067 = vmatpush.msra.mxu0 %v1044
        %1068 = vmatpush.msra.mxu0 %v1042
        %1069 = vmatmul.f32.gmra.mxu0 %v1048
        %v1070 = vpop.f32.mrf.mxu0
        %v1071 = vadd.f32 0.0, %v1070
        %1072 = vmatmul.f32.gmra.mxu0 %v1051
        %v1073 = vpop.f32.mrf.mxu0
        %v1074 = vadd.f32 0.0, %v1073
        %1075 = vdwg.mxu0
        %1078 = vrot.lane.b32.xlu0 %v1071, 96
        %v1079 = vpop.permute.xlu0 %1078
        %1080 = vrot.lane.b32.xlu0 %v1074, 96
        %v1081 = vpop.permute.xlu0 %1080
        %vm1084 = vcmask 1048320
        %1085 = vst.msk [vmem:[#allocation2] sm:$0xff] %vm1084, %v1079
        %1086 = vst.msk [vmem:[#allocation2 + $0x10] sm:$0xff] %vm1084, %v1081
        %v1088 = vsel %vm623, %v526, 0
        %v1091 = vsel %vm623, %v529, 0
        %v1094 = vsel %vm623, %v572, 0
        %v1097 = vsel %vm623, %v575, 0
        %1099 = vmatpush.xpose.msra.mxu0 0.0
        %1100 = vmatpush.xpose.msra.mxu0 0.0
        %1101 = vmatpush.xpose.msra.mxu0 0.0
        %1102 = vmatpush.xpose.msra.mxu0 0.0
        %1103 = vmatpush.xpose.msra.mxu0 0.0
        %1104 = vmatpush.xpose.msra.mxu0 0.0
        %1105 = vmatpush.xpose.msra.mxu0 0.0
        %1106 = vmatpush.xpose.msra.mxu0 0.0
        %1107 = vmatpush.xpose.msra.mxu0 0.0
        %1108 = vmatpush.xpose.msra.mxu0 0.0
        %1109 = vmatpush.xpose.msra.mxu0 0.0
        %1110 = vmatpush.xpose.msra.mxu0 0.0
        %1111 = vmatpush.xpose.msra.mxu0 0.0
        %1112 = vmatpush.xpose.msra.mxu0 0.0
        %1113 = vmatpush.xpose.msra.mxu0 %v1097
        %1114 = vmatpush.xpose.msra.mxu0 %v1094
        %1115 = vmatmul.f32.gmra.mxu0 %v1088
        %v1116 = vpop.f32.mrf.mxu0
        %v1117 = vadd.f32 0.0, %v1116
        %1118 = vmatmul.f32.gmra.mxu0 %v1091
        %v1119 = vpop.f32.mrf.mxu0
        %v1120 = vadd.f32 0.0, %v1119
        %1121 = vdwg.mxu0
        %v1122 = vmul.f32 %v1117, 0.17677669
        %v1123 = vmul.f32 %v1120, 0.17677669
        %s1124 = scalar_lea.vmem [#allocation7], 64
        %v1125 = vld [vmem:[%s1124] sm:$0xff]
        %v1126 = vld [vmem:[%s1124 + $0x8] sm:$0xff]
        %v1127 = vadd.f32 %v1122, %v1125
        %v1128 = vadd.f32 %v1123, %v1126
        %v1129 = vsel %vm665, %v1127, -inf
        %1130 = vmax.xlane.f32.xlu0 %v1129
        %v1131 = vpop.xlane.xlu0 %1130
        %v1132 = vsel %vm665, %v1128, -inf
        %1133 = vmax.xlane.f32.xlu0 %v1132
        %v1134 = vpop.xlane.xlu0 %1133
        %v1135 = vsub.f32 %v1127, %v1131
        %v1136 = vsub.f32 %v1128, %v1134
        %v1137 = vmul.f32 %v1135, 1.442695
        %v1138 = vpow.pop %v1137
        %v1139 = vmul.f32 %v1136, 1.442695
        %v1140 = vpow.pop %v1139
        %v1141 = vsel %vm665, %v1138, 0.0
        %1142 = vadd.xlane.f32.xlu0 %v1141
        %v1143 = vpop.xlane.xlu0 %1142
        %v1144 = vsel %vm665, %v1140, 0.0
        %1145 = vadd.xlane.f32.xlu0 %v1144
        %v1146 = vpop.xlane.xlu0 %1145
        %v1147 = vrcp.pop %v1143
        %v1148 = vrcp.pop %v1146
        %v1149 = vmul.f32 %v1143, %v1147
        %v1150 = vmul.f32 %v1146, %v1148
        %v1151 = vsub.f32 2.0, %v1149
        %v1152 = vsub.f32 2.0, %v1150
        %v1153 = vmul.f32 %v1147, %v1151
        %v1154 = vmul.f32 %v1148, %v1152
        %v1155 = vmul.f32 %v1138, %v1153
        %v1156 = vmul.f32 %v1140, %v1154
        %v1158 = vsel %vm665, %v1155, 0
        %v1161 = vsel %vm665, %v1156, 0
        %1163 = vmatpush.msra.mxu0 0.0
        %1164 = vmatpush.msra.mxu0 0.0
        %1165 = vmatpush.msra.mxu0 0.0
        %1166 = vmatpush.msra.mxu0 0.0
        %1167 = vmatpush.msra.mxu0 0.0
        %1168 = vmatpush.msra.mxu0 0.0
        %1169 = vmatpush.msra.mxu0 0.0
        %1170 = vmatpush.msra.mxu0 0.0
        %1171 = vmatpush.msra.mxu0 0.0
        %1172 = vmatpush.msra.mxu0 0.0
        %1173 = vmatpush.msra.mxu0 0.0
        %1174 = vmatpush.msra.mxu0 0.0
        %1175 = vmatpush.msra.mxu0 0.0
        %1176 = vmatpush.msra.mxu0 0.0
        %1177 = vmatpush.msra.mxu0 %v621
        %1178 = vmatpush.msra.mxu0 %v618
        %1179 = vmatmul.f32.gmra.mxu0 %v1158
        %v1180 = vpop.f32.mrf.mxu0
        %v1181 = vadd.f32 0.0, %v1180
        %1182 = vmatmul.f32.gmra.mxu0 %v1161
        %v1183 = vpop.f32.mrf.mxu0
        %v1184 = vadd.f32 0.0, %v1183
        %1185 = vdwg.mxu0
        %1186 = vst.msk [vmem:[#allocation2 + $0x8] sm:$0xff] %vm623, %v1181
        %1187 = vst.msk [vmem:[#allocation2 + $0x18] sm:$0xff] %vm623, %v1184
        %1188 = vrot.lane.b32.xlu0 %v526, 96
        %v1189 = vpop.permute.xlu0 %1188
        %1190 = vrot.lane.b32.xlu0 %v529, 96
        %v1191 = vpop.permute.xlu0 %1190
        %1192 = vrot.lane.b32.xlu0 %v572, 96
        %v1193 = vpop.permute.xlu0 %1192
        %1194 = vrot.lane.b32.xlu0 %v575, 96
        %v1195 = vpop.permute.xlu0 %1194
        %v1196 = vsel %vm623, %v1189, 0
        %v1198 = vsel %vm623, %v1191, 0
        %v1200 = vsel %vm623, %v1193, 0
        %v1202 = vsel %vm623, %v1195, 0
        %1204 = vmatpush.xpose.msra.mxu0 0.0
        %1205 = vmatpush.xpose.msra.mxu0 0.0
        %1206 = vmatpush.xpose.msra.mxu0 0.0
        %1207 = vmatpush.xpose.msra.mxu0 0.0
        %1208 = vmatpush.xpose.msra.mxu0 0.0
        %1209 = vmatpush.xpose.msra.mxu0 0.0
        %1210 = vmatpush.xpose.msra.mxu0 0.0
        %1211 = vmatpush.xpose.msra.mxu0 0.0
        %1212 = vmatpush.xpose.msra.mxu0 0.0
        %1213 = vmatpush.xpose.msra.mxu0 0.0
        %1214 = vmatpush.xpose.msra.mxu0 0.0
        %1215 = vmatpush.xpose.msra.mxu0 0.0
        %1216 = vmatpush.xpose.msra.mxu0 0.0
        %1217 = vmatpush.xpose.msra.mxu0 0.0
        %1218 = vmatpush.xpose.msra.mxu0 %v1202
        %1219 = vmatpush.xpose.msra.mxu0 %v1200
        %1220 = vmatmul.f32.gmra.mxu0 %v1196
        %v1221 = vpop.f32.mrf.mxu0
        %v1222 = vadd.f32 0.0, %v1221
        %1223 = vmatmul.f32.gmra.mxu0 %v1198
        %v1224 = vpop.f32.mrf.mxu0
        %v1225 = vadd.f32 0.0, %v1224
        %1226 = vdwg.mxu0
        %v1227 = vmul.f32 %v1222, 0.17677669
        %v1228 = vmul.f32 %v1225, 0.17677669
        %s1229 = scalar_lea.vmem [#allocation7], 80
        %v1230 = vld [vmem:[%s1229] sm:$0xff]
        %v1231 = vld [vmem:[%s1229 + $0x8] sm:$0xff]
        %v1232 = vadd.f32 %v1227, %v1230
        %v1233 = vadd.f32 %v1228, %v1231
        %v1234 = vsel %vm665, %v1232, -inf
        %1235 = vmax.xlane.f32.xlu0 %v1234
        %v1236 = vpop.xlane.xlu0 %1235
        %v1237 = vsel %vm665, %v1233, -inf
        %1238 = vmax.xlane.f32.xlu0 %v1237
        %v1239 = vpop.xlane.xlu0 %1238
        %v1240 = vsub.f32 %v1232, %v1236
        %v1241 = vsub.f32 %v1233, %v1239
        %v1242 = vmul.f32 %v1240, 1.442695
        %v1243 = vpow.pop %v1242
        %v1244 = vmul.f32 %v1241, 1.442695
        %v1245 = vpow.pop %v1244
        %v1246 = vsel %vm665, %v1243, 0.0
        %1247 = vadd.xlane.f32.xlu0 %v1246
        %v1248 = vpop.xlane.xlu0 %1247
        %v1249 = vsel %vm665, %v1245, 0.0
        %1250 = vadd.xlane.f32.xlu0 %v1249
        %v1251 = vpop.xlane.xlu0 %1250
        %v1252 = vrcp.pop %v1248
        %v1253 = vrcp.pop %v1251
        %v1254 = vmul.f32 %v1248, %v1252
        %v1255 = vmul.f32 %v1251, %v1253
        %v1256 = vsub.f32 2.0, %v1254
        %v1257 = vsub.f32 2.0, %v1255
        %v1258 = vmul.f32 %v1252, %v1256
        %v1259 = vmul.f32 %v1253, %v1257
        %v1260 = vmul.f32 %v1243, %v1258
        %v1261 = vmul.f32 %v1245, %v1259
        %1264 = vrot.lane.b32.xlu0 %v618, 96
        %v1265 = vpop.permute.xlu0 %1264
        %1266 = vrot.lane.b32.xlu0 %v621, 96
        %v1267 = vpop.permute.xlu0 %1266
        %v1271 = vsel %vm665, %v1260, 0
        %v1274 = vsel %vm665, %v1261, 0
        %1276 = vmatpush.msra.mxu0 0.0
        %1277 = vmatpush.msra.mxu0 0.0
        %1278 = vmatpush.msra.mxu0 0.0
        %1279 = vmatpush.msra.mxu0 0.0
        %1280 = vmatpush.msra.mxu0 0.0
        %1281 = vmatpush.msra.mxu0 0.0
        %1282 = vmatpush.msra.mxu0 0.0
        %1283 = vmatpush.msra.mxu0 0.0
        %1284 = vmatpush.msra.mxu0 0.0
        %1285 = vmatpush.msra.mxu0 0.0
        %1286 = vmatpush.msra.mxu0 0.0
        %1287 = vmatpush.msra.mxu0 0.0
        %1288 = vmatpush.msra.mxu0 0.0
        %1289 = vmatpush.msra.mxu0 0.0
        %1290 = vmatpush.msra.mxu0 %v1267
        %1291 = vmatpush.msra.mxu0 %v1265
        %1292 = vmatmul.f32.gmra.mxu0 %v1271
        %v1293 = vpop.f32.mrf.mxu0
        %v1294 = vadd.f32 0.0, %v1293
        %1295 = vmatmul.f32.gmra.mxu0 %v1274
        %v1296 = vpop.f32.mrf.mxu0
        %v1297 = vadd.f32 0.0, %v1296
        %1298 = vdwg.mxu0
        %1301 = vrot.lane.b32.xlu0 %v1294, 32
        %v1302 = vpop.permute.xlu0 %1301
        %1303 = vrot.lane.b32.xlu0 %v1297, 32
        %v1304 = vpop.permute.xlu0 %1303
        %1307 = vst.msk [vmem:[#allocation2 + $0x8] sm:$0xff] %vm844, %v1302
        %1308 = vst.msk [vmem:[#allocation2 + $0x18] sm:$0xff] %vm844, %v1304
        %1309 = vrot.lane.b32.xlu0 %v526, 64
        %v1310 = vpop.permute.xlu0 %1309
        %1311 = vrot.lane.b32.xlu0 %v529, 64
        %v1312 = vpop.permute.xlu0 %1311
        %1313 = vrot.lane.b32.xlu0 %v572, 64
        %v1314 = vpop.permute.xlu0 %1313
        %1315 = vrot.lane.b32.xlu0 %v575, 64
        %v1316 = vpop.permute.xlu0 %1315
        %v1317 = vsel %vm623, %v1310, 0
        %v1319 = vsel %vm623, %v1312, 0
        %v1321 = vsel %vm623, %v1314, 0
        %v1323 = vsel %vm623, %v1316, 0
        %1325 = vmatpush.xpose.msra.mxu0 0.0
        %1326 = vmatpush.xpose.msra.mxu0 0.0
        %1327 = vmatpush.xpose.msra.mxu0 0.0
        %1328 = vmatpush.xpose.msra.mxu0 0.0
        %1329 = vmatpush.xpose.msra.mxu0 0.0
        %1330 = vmatpush.xpose.msra.mxu0 0.0
        %1331 = vmatpush.xpose.msra.mxu0 0.0
        %1332 = vmatpush.xpose.msra.mxu0 0.0
        %1333 = vmatpush.xpose.msra.mxu0 0.0
        %1334 = vmatpush.xpose.msra.mxu0 0.0
        %1335 = vmatpush.xpose.msra.mxu0 0.0
        %1336 = vmatpush.xpose.msra.mxu0 0.0
        %1337 = vmatpush.xpose.msra.mxu0 0.0
        %1338 = vmatpush.xpose.msra.mxu0 0.0
        %1339 = vmatpush.xpose.msra.mxu0 %v1323
        %1340 = vmatpush.xpose.msra.mxu0 %v1321
        %1341 = vmatmul.f32.gmra.mxu0 %v1317
        %v1342 = vpop.f32.mrf.mxu0
        %v1343 = vadd.f32 0.0, %v1342
        %1344 = vmatmul.f32.gmra.mxu0 %v1319
        %v1345 = vpop.f32.mrf.mxu0
        %v1346 = vadd.f32 0.0, %v1345
        %1347 = vdwg.mxu0
        %v1348 = vmul.f32 %v1343, 0.17677669
        %v1349 = vmul.f32 %v1346, 0.17677669
        %s1350 = scalar_lea.vmem [#allocation7], 96
        %v1351 = vld [vmem:[%s1350] sm:$0xff]
        %v1352 = vld [vmem:[%s1350 + $0x8] sm:$0xff]
        %v1353 = vadd.f32 %v1348, %v1351
        %v1354 = vadd.f32 %v1349, %v1352
        %v1355 = vsel %vm665, %v1353, -inf
        %1356 = vmax.xlane.f32.xlu0 %v1355
        %v1357 = vpop.xlane.xlu0 %1356
        %v1358 = vsel %vm665, %v1354, -inf
        %1359 = vmax.xlane.f32.xlu0 %v1358
        %v1360 = vpop.xlane.xlu0 %1359
        %v1361 = vsub.f32 %v1353, %v1357
        %v1362 = vsub.f32 %v1354, %v1360
        %v1363 = vmul.f32 %v1361, 1.442695
        %v1364 = vpow.pop %v1363
        %v1365 = vmul.f32 %v1362, 1.442695
        %v1366 = vpow.pop %v1365
        %v1367 = vsel %vm665, %v1364, 0.0
        %1368 = vadd.xlane.f32.xlu0 %v1367
        %v1369 = vpop.xlane.xlu0 %1368
        %v1370 = vsel %vm665, %v1366, 0.0
        %1371 = vadd.xlane.f32.xlu0 %v1370
        %v1372 = vpop.xlane.xlu0 %1371
        %v1373 = vrcp.pop %v1369
        %v1374 = vrcp.pop %v1372
        %v1375 = vmul.f32 %v1369, %v1373
        %v1376 = vmul.f32 %v1372, %v1374
        %v1377 = vsub.f32 2.0, %v1375
        %v1378 = vsub.f32 2.0, %v1376
        %v1379 = vmul.f32 %v1373, %v1377
        %v1380 = vmul.f32 %v1374, %v1378
        %v1381 = vmul.f32 %v1364, %v1379
        %v1382 = vmul.f32 %v1366, %v1380
        %1383 = vrot.lane.b32.xlu0 %v618, 64
        %v1384 = vpop.permute.xlu0 %1383
        %1385 = vrot.lane.b32.xlu0 %v621, 64
        %v1386 = vpop.permute.xlu0 %1385
        %v1390 = vsel %vm665, %v1381, 0
        %v1393 = vsel %vm665, %v1382, 0
        %1395 = vmatpush.msra.mxu0 0.0
        %1396 = vmatpush.msra.mxu0 0.0
        %1397 = vmatpush.msra.mxu0 0.0
        %1398 = vmatpush.msra.mxu0 0.0
        %1399 = vmatpush.msra.mxu0 0.0
        %1400 = vmatpush.msra.mxu0 0.0
        %1401 = vmatpush.msra.mxu0 0.0
        %1402 = vmatpush.msra.mxu0 0.0
        %1403 = vmatpush.msra.mxu0 0.0
        %1404 = vmatpush.msra.mxu0 0.0
        %1405 = vmatpush.msra.mxu0 0.0
        %1406 = vmatpush.msra.mxu0 0.0
        %1407 = vmatpush.msra.mxu0 0.0
        %1408 = vmatpush.msra.mxu0 0.0
        %1409 = vmatpush.msra.mxu0 %v1386
        %1410 = vmatpush.msra.mxu0 %v1384
        %1411 = vmatmul.f32.gmra.mxu0 %v1390
        %v1412 = vpop.f32.mrf.mxu0
        %v1413 = vadd.f32 0.0, %v1412
        %1414 = vmatmul.f32.gmra.mxu0 %v1393
        %v1415 = vpop.f32.mrf.mxu0
        %v1416 = vadd.f32 0.0, %v1415
        %1417 = vdwg.mxu0
        %1420 = vrot.lane.b32.xlu0 %v1413, 64
        %v1421 = vpop.permute.xlu0 %1420
        %1422 = vrot.lane.b32.xlu0 %v1416, 64
        %v1423 = vpop.permute.xlu0 %1422
        %1426 = vst.msk [vmem:[#allocation2 + $0x8] sm:$0xff] %vm964, %v1421
        %1427 = vst.msk [vmem:[#allocation2 + $0x18] sm:$0xff] %vm964, %v1423
        %1428 = vrot.lane.b32.xlu0 %v526, 32
        %v1429 = vpop.permute.xlu0 %1428
        %1430 = vrot.lane.b32.xlu0 %v529, 32
        %v1431 = vpop.permute.xlu0 %1430
        %1432 = vrot.lane.b32.xlu0 %v572, 32
        %v1433 = vpop.permute.xlu0 %1432
        %1434 = vrot.lane.b32.xlu0 %v575, 32
        %v1435 = vpop.permute.xlu0 %1434
        %v1436 = vsel %vm623, %v1429, 0
        %v1438 = vsel %vm623, %v1431, 0
        %v1440 = vsel %vm623, %v1433, 0
        %v1442 = vsel %vm623, %v1435, 0
        %1444 = vmatpush.xpose.msra.mxu0 0.0
        %1445 = vmatpush.xpose.msra.mxu0 0.0
        %1446 = vmatpush.xpose.msra.mxu0 0.0
        %1447 = vmatpush.xpose.msra.mxu0 0.0
        %1448 = vmatpush.xpose.msra.mxu0 0.0
        %1449 = vmatpush.xpose.msra.mxu0 0.0
        %1450 = vmatpush.xpose.msra.mxu0 0.0
        %1451 = vmatpush.xpose.msra.mxu0 0.0
        %1452 = vmatpush.xpose.msra.mxu0 0.0
        %1453 = vmatpush.xpose.msra.mxu0 0.0
        %1454 = vmatpush.xpose.msra.mxu0 0.0
        %1455 = vmatpush.xpose.msra.mxu0 0.0
        %1456 = vmatpush.xpose.msra.mxu0 0.0
        %1457 = vmatpush.xpose.msra.mxu0 0.0
        %1458 = vmatpush.xpose.msra.mxu0 %v1442
        %1459 = vmatpush.xpose.msra.mxu0 %v1440
        %1460 = vmatmul.f32.gmra.mxu0 %v1436
        %v1461 = vpop.f32.mrf.mxu0
        %v1462 = vadd.f32 0.0, %v1461
        %1463 = vmatmul.f32.gmra.mxu0 %v1438
        %v1464 = vpop.f32.mrf.mxu0
        %v1465 = vadd.f32 0.0, %v1464
        %1466 = vdwg.mxu0
        %v1467 = vmul.f32 %v1462, 0.17677669
        %v1468 = vmul.f32 %v1465, 0.17677669
        %s1469 = scalar_lea.vmem [#allocation7], 112
        %v1470 = vld [vmem:[%s1469] sm:$0xff]
        %v1471 = vld [vmem:[%s1469 + $0x8] sm:$0xff]
        %v1472 = vadd.f32 %v1467, %v1470
        %v1473 = vadd.f32 %v1468, %v1471
        %v1474 = vsel %vm665, %v1472, -inf
        %1475 = vmax.xlane.f32.xlu0 %v1474
        %v1476 = vpop.xlane.xlu0 %1475
        %v1477 = vsel %vm665, %v1473, -inf
        %1478 = vmax.xlane.f32.xlu0 %v1477
        %v1479 = vpop.xlane.xlu0 %1478
        %v1480 = vsub.f32 %v1472, %v1476
        %v1481 = vsub.f32 %v1473, %v1479
        %v1482 = vmul.f32 %v1480, 1.442695
        %v1483 = vpow.pop %v1482
        %v1484 = vmul.f32 %v1481, 1.442695
        %v1485 = vpow.pop %v1484
        %v1486 = vsel %vm665, %v1483, 0.0
        %1487 = vadd.xlane.f32.xlu0 %v1486
        %v1488 = vpop.xlane.xlu0 %1487
        %v1489 = vsel %vm665, %v1485, 0.0
        %1490 = vadd.xlane.f32.xlu0 %v1489
        %v1491 = vpop.xlane.xlu0 %1490
        %v1492 = vrcp.pop %v1488
        %v1493 = vrcp.pop %v1491
        %v1494 = vmul.f32 %v1488, %v1492
        %v1495 = vmul.f32 %v1491, %v1493
        %v1496 = vsub.f32 2.0, %v1494
        %v1497 = vsub.f32 2.0, %v1495
        %v1498 = vmul.f32 %v1492, %v1496
        %v1499 = vmul.f32 %v1493, %v1497
        %v1500 = vmul.f32 %v1483, %v1498
        %v1501 = vmul.f32 %v1485, %v1499
        %1502 = vrot.lane.b32.xlu0 %v618, 32
        %v1503 = vpop.permute.xlu0 %1502
        %1504 = vrot.lane.b32.xlu0 %v621, 32
        %v1505 = vpop.permute.xlu0 %1504
        %v1509 = vsel %vm665, %v1500, 0
        %v1512 = vsel %vm665, %v1501, 0
        %1514 = vmatpush.msra.mxu0 0.0
        %1515 = vmatpush.msra.mxu0 0.0
        %1516 = vmatpush.msra.mxu0 0.0
        %1517 = vmatpush.msra.mxu0 0.0
        %1518 = vmatpush.msra.mxu0 0.0
        %1519 = vmatpush.msra.mxu0 0.0
        %1520 = vmatpush.msra.mxu0 0.0
        %1521 = vmatpush.msra.mxu0 0.0
        %1522 = vmatpush.msra.mxu0 0.0
        %1523 = vmatpush.msra.mxu0 0.0
        %1524 = vmatpush.msra.mxu0 0.0
        %1525 = vmatpush.msra.mxu0 0.0
        %1526 = vmatpush.msra.mxu0 0.0
        %1527 = vmatpush.msra.mxu0 0.0
        %1528 = vmatpush.msra.mxu0 %v1505
        %1529 = vmatpush.msra.mxu0 %v1503
        %1530 = vmatmul.f32.gmra.mxu0 %v1509
        %v1531 = vpop.f32.mrf.mxu0
        %v1532 = vadd.f32 0.0, %v1531
        %1533 = vmatmul.f32.gmra.mxu0 %v1512
        %v1534 = vpop.f32.mrf.mxu0
        %v1535 = vadd.f32 0.0, %v1534
        %1536 = vdwg.mxu0
        %1539 = vrot.lane.b32.xlu0 %v1532, 96
        %v1540 = vpop.permute.xlu0 %1539
        %1541 = vrot.lane.b32.xlu0 %v1535, 96
        %v1542 = vpop.permute.xlu0 %1541
        %1545 = vst.msk [vmem:[#allocation2 + $0x8] sm:$0xff] %vm1084, %v1540
        %1546 = vst.msk [vmem:[#allocation2 + $0x18] sm:$0xff] %vm1084, %v1542
        %v1547 = vld [vmem:[#allocation2] sm:$0xff]
        %v1548 = vld [vmem:[#allocation2 + $0x8] sm:$0xff]
        %v1549 = vld [vmem:[#allocation2 + $0x10] sm:$0xff]
        %v1550 = vld [vmem:[#allocation2 + $0x18] sm:$0xff]
        %v1551 = vld [vmem:[#allocation5] sm:$0xff]
        %v1552 = vld [vmem:[#allocation5 + $0x8] sm:$0xff]
        %v1553 = vld [vmem:[#allocation5 + $0x10] sm:$0xff]
        %v1554 = vld [vmem:[#allocation5 + $0x18] sm:$0xff]
        %v1555 = vld [vmem:[#allocation5 + $0x20] sm:$0xff]
        %v1556 = vld [vmem:[#allocation5 + $0x28] sm:$0xff]
        %v1557 = vld [vmem:[#allocation5 + $0x30] sm:$0xff]
        %v1558 = vld [vmem:[#allocation5 + $0x38] sm:$0xff]
        %v1559 = vld [vmem:[#allocation5 + $0x40] sm:$0xff]
        %v1560 = vld [vmem:[#allocation5 + $0x48] sm:$0xff]
        %v1561 = vld [vmem:[#allocation5 + $0x50] sm:$0xff]
        %v1562 = vld [vmem:[#allocation5 + $0x58] sm:$0xff]
        %v1563 = vld [vmem:[#allocation5 + $0x60] sm:$0xff]
        %v1564 = vld [vmem:[#allocation5 + $0x68] sm:$0xff]
        %v1565 = vld [vmem:[#allocation5 + $0x70] sm:$0xff]
        %v1566 = vld [vmem:[#allocation5 + $0x78] sm:$0xff]
        %v1567 = vld [vmem:[#allocation5 + $0x80] sm:$0xff]
        %v1568 = vld [vmem:[#allocation5 + $0x88] sm:$0xff]
        %v1569 = vld [vmem:[#allocation5 + $0x90] sm:$0xff]
        %v1570 = vld [vmem:[#allocation5 + $0x98] sm:$0xff]
        %v1571 = vld [vmem:[#allocation5 + $0xa0] sm:$0xff]
        %v1572 = vld [vmem:[#allocation5 + $0xa8] sm:$0xff]
        %v1573 = vld [vmem:[#allocation5 + $0xb0] sm:$0xff]
        %v1574 = vld [vmem:[#allocation5 + $0xb8] sm:$0xff]
        %v1575 = vld [vmem:[#allocation5 + $0xc0] sm:$0xff]
        %v1576 = vld [vmem:[#allocation5 + $0xc8] sm:$0xff]
        %v1577 = vld [vmem:[#allocation5 + $0xd0] sm:$0xff]
        %v1578 = vld [vmem:[#allocation5 + $0xd8] sm:$0xff]
        %v1579 = vld [vmem:[#allocation5 + $0xe0] sm:$0xff]
        %v1580 = vld [vmem:[#allocation5 + $0xe8] sm:$0xff]
        %v1581 = vld [vmem:[#allocation5 + $0xf0] sm:$0xff]
        %v1582 = vld [vmem:[#allocation5 + $0xf8] sm:$0xff]
        %v1583 = vld [vmem:[%s5] sm:$0x1]
        %v1585 = vperm.slane %v1583, 0
        %1587 = vmatpush.msra.mxu0 %v1566
        %1588 = vmatpush.msra.mxu0 %v1565
        %1589 = vmatpush.msra.mxu0 %v1564
        %1590 = vmatpush.msra.mxu0 %v1563
        %1591 = vmatpush.msra.mxu0 %v1562
        %1592 = vmatpush.msra.mxu0 %v1561
        %1593 = vmatpush.msra.mxu0 %v1560
        %1594 = vmatpush.msra.mxu0 %v1559
        %1595 = vmatpush.msra.mxu0 %v1558
        %1596 = vmatpush.msra.mxu0 %v1557
        %1597 = vmatpush.msra.mxu0 %v1556
        %1598 = vmatpush.msra.mxu0 %v1555
        %1599 = vmatpush.msra.mxu0 %v1554
        %1600 = vmatpush.msra.mxu0 %v1553
        %1601 = vmatpush.msra.mxu0 %v1552
        %1602 = vmatpush.msra.mxu0 %v1551
        %1603 = vmatmul.f32.gmra.mxu0 %v1547
        %v1604 = vpop.f32.mrf.mxu0
        %v1605 = vadd.f32 %v1585, %v1604
        %1606 = vmatmul.f32.gmra.mxu0 %v1549
        %v1607 = vpop.f32.mrf.mxu0
        %v1608 = vadd.f32 %v1585, %v1607
        %1609 = vdwg.mxu0
        %1610 = vmatpush.msra.mxu0 %v1582
        %1611 = vmatpush.msra.mxu0 %v1581
        %1612 = vmatpush.msra.mxu0 %v1580
        %1613 = vmatpush.msra.mxu0 %v1579
        %1614 = vmatpush.msra.mxu0 %v1578
        %1615 = vmatpush.msra.mxu0 %v1577
        %1616 = vmatpush.msra.mxu0 %v1576
        %1617 = vmatpush.msra.mxu0 %v1575
        %1618 = vmatpush.msra.mxu0 %v1574
        %1619 = vmatpush.msra.mxu0 %v1573
        %1620 = vmatpush.msra.mxu0 %v1572
        %1621 = vmatpush.msra.mxu0 %v1571
        %1622 = vmatpush.msra.mxu0 %v1570
        %1623 = vmatpush.msra.mxu0 %v1569
        %1624 = vmatpush.msra.mxu0 %v1568
        %1625 = vmatpush.msra.mxu0 %v1567
        %1626 = vmatmul.f32.gmra.mxu0 %v1548
        %v1627 = vpop.f32.mrf.mxu0
        %v1628 = vadd.f32 %v1605, %v1627
        %1629 = vmatmul.f32.gmra.mxu0 %v1550
        %v1630 = vpop.f32.mrf.mxu0
        %v1631 = vadd.f32 %v1608, %v1630
        %1632 = vdwg.mxu0
        %v1633 = vadd.f32 %v329, %v1628
        %v1634 = vadd.f32 %v330, %v1631
        %1635 = vst [vmem:[%s328] sm:$0xff] %v1633
        %1636 = vst [vmem:[%s328 + $0x8] sm:$0xff] %v1634
        %p1637 = scmp.lt.s32.totalorder %s20, 1
        %s1638 = scalar_select %p1637, %s20, 1
        %s1639 = smul.addr %s1638, 2
        %s1640 = smul.addr %s1639, 8
        %s1641 = scalar_lea.vmem %s7, %s1640
        // Predicated region
        $region61: #{transformer_forward.2} parent=47 // pred_check
          %p1642 = pneg %p190
        $region62: #{transformer_forward.2} parent=47 // pred_check_branch
          %1644 = sbr.rel (%p1642) target = $region64
        $region63: #{transformer_forward.2} parent=47 // pred_region
          _
        $region64: #{transformer_forward.2} parent=47 // pred_fallthru
          _
      $region48: #{transformer_forward.2} parent=5 // pred_fallthru
        _
      %p1645 = scmp.le.s32.totalorder 2, %s15
      // Predicated region
      $region65: #{transformer_forward.2} parent=5 // pred_check
        %p1646 = pneg %p1645
      $region66: #{transformer_forward.2} parent=5 // pred_check_branch
        %1648 = sbr.rel (%p1646) target = $region68
      $region67: #{transformer_forward.2} parent=5 // pred_region
        %s1649 = ssub.s32 %s15, 2
        // Predicated region
        $region69: #{transformer_forward.2} parent=67 // pred_check
          %p1650 = pneg %p196
        $region70: #{transformer_forward.2} parent=67 // pred_check_branch
          %1652 = sbr.rel (%p1650) target = $region72
        $region71: #{transformer_forward.2} parent=67 // pred_region
          %p1653 = scmp.lt.s32.totalorder %s21, 1
          %s1654 = scalar_select %p1653, %s21, 1
          %s1655 = smul.addr %s1654, 2
          %s1656 = smul.addr %s1655, 8
          %s1657 = scalar_lea.vmem %s7, %s1656
        $region72: #{transformer_forward.2} parent=67 // pred_fallthru
          _
      $region68: #{transformer_forward.2} parent=5 // pred_fallthru
        _
    $region6: #{transformer_forward.2} parent=1 // loop_footer
      %s19 = sadd.s32 1, %s15
    $region7: #{transformer_forward.2} parent=1 // loop_footer_branch
      %14 = sbr.rel target = $region3
    $region8: #{transformer_forward.2} parent=1 // loop_exit
      _
    %1658 = vsyncpa [#allocation4], 1
    %s1659 = scalar_lea.sflag [#allocation4], 1
    %1660 = vsyncpa %s1659, 1
    %1661 = vsyncpa [#allocation6], 1

</llo_original>
